<compile_context>
chip_gen: v5e
topology: v5e:2x2
jax: 0.10.0
libtpu: 0.0.40
codegen_flags: <defaults>
</compile_context>

<pallas_src>
import jax
import jax.numpy as jnp
from jax.experimental import pallas as pl
from jax.experimental.pallas import tpu as pltpu


def _gelu_tanh(v):
    # TODO(synk): tanh-approximate GELU; PyTorch nn.GELU() default is the exact
    # erf form (difference ~1e-3). tanh is used for robust Mosaic (EUP) lowering.
    c = 0.7978845608028654  # sqrt(2/pi)
    return 0.5 * v * (1.0 + jnp.tanh(c * (v + 0.044715 * v * v * v)))


def _make_cross_block_kernel(C, num_heads, Hm, scale):
    hd = C // num_heads
    f32 = jnp.float32

    def _layernorm(v, gamma, beta, eps=1e-5):
        # Single-pass statistics: sum and sum-of-squares computed together
        # (one XLU reduction chain per branch instead of two dependent ones).
        n = v.shape[-1]
        s1 = jnp.sum(v, axis=-1, keepdims=True)
        s2 = jnp.sum(v * v, axis=-1, keepdims=True)
        mu = s1 * (1.0 / n)
        var = s2 * (1.0 / n) - mu * mu
        inv = jax.lax.rsqrt(var + eps)
        return (v - mu) * inv * gamma + beta

    def _attend_project(q_all, k_all, v_all, w_proj_ref):
        # q/k/v: (N, C) with head h in columns [h*hd, (h+1)*hd).
        # Returns proj(multi-head attention output) WITHOUT the bias:
        # the head-merge is folded into the projection as a sum of per-head matmuls.
        dn = (((1,), (1,)), ((), ()))  # contract last dims: q @ k^T, no transpose op
        acc = None
        for h in range(num_heads):
            lo, hi = h * hd, (h + 1) * hd
            q = q_all[:, lo:hi]
            k = k_all[:, lo:hi]
            v = v_all[:, lo:hi]
            s = jax.lax.dot_general(q, k, dn, preferred_element_type=f32) * scale
            s = s - jnp.max(s, axis=-1, keepdims=True)
            e = jnp.exp(s)
            p = e / jnp.sum(e, axis=-1, keepdims=True)
            o = jnp.dot(p, v, preferred_element_type=f32)                 # (N, hd)
            contrib = jnp.dot(o, w_proj_ref[lo:hi, :], preferred_element_type=f32)
            acc = contrib if acc is None else acc + contrib
        return acc                                                         # (N, C)

    def kernel(xy_ref, vec_ref, w_in_ref, w_fc2_ref, out_ref):
        # xy_ref:   (N, 2C)   lane-dense x||y for one batch element
        # vec_ref:  (16, W)   all 1-D params (row layout documented in the wrapper)
        # w_in_ref: (C, 8C+2Hm)   qkv_x | qkv_y | proj_y | proj_x | fc1_1 | fc1_2
        # w_fc2_ref:(Hm, 2C)  fc2_1 | fc2_2
        xy_in = xy_ref[...].astype(f32)
        x_in = xy_in[:, :C]
        y_in = xy_in[:, C:]

        g11, be11 = vec_ref[0:1, :C], vec_ref[1:2, :C]
        g12, be12 = vec_ref[2:3, :C], vec_ref[3:4, :C]
        g21, be21 = vec_ref[4:5, :C], vec_ref[5:6, :C]
        g22, be22 = vec_ref[6:7, :C], vec_ref[7:8, :C]
        b_proj_y, b_proj_x = vec_ref[8:9, :C], vec_ref[9:10, :C]
        b_fc2_1, b_fc2_2 = vec_ref[10:11, :C], vec_ref[11:12, :C]
        b_fc1_1, b_fc1_2 = vec_ref[12:13, :Hm], vec_ref[13:14, :Hm]

        # --- cross attention --------------------------------------------------
        xn = _layernorm(x_in, g11, be11)          # norm11
        yn = _layernorm(y_in, g12, be12)          # norm12

        # fused qkv: one dot per stream produces q|k|v together
        qkv_x = jnp.dot(xn, w_in_ref[:, 0:3 * C], preferred_element_type=f32)
        qkv_y = jnp.dot(yn, w_in_ref[:, 3 * C:6 * C], preferred_element_type=f32)

        q_x, k_x, v_x = qkv_x[:, :C], qkv_x[:, C:2 * C], qkv_x[:, 2 * C:]
        q_y, k_y, v_y = qkv_y[:, :C], qkv_y[:, C:2 * C], qkv_y[:, 2 * C:]

        w_proj_y = w_in_ref[:, 6 * C:7 * C]
        w_proj_x = w_in_ref[:, 7 * C:8 * C]

        xy = _attend_project(q_x, k_y, v_y, w_proj_y) + b_proj_y   # x attends to y
        yx = _attend_project(q_y, k_x, v_x, w_proj_x) + b_proj_x   # y attends to x

        # CrossAttention returns (yx, xy); CrossBlock assigns x <- yx, y <- xy.
        # TODO(synk): drop_path / dropout have ratio 0.0 (eval), i.e. identity,
        # so x + drop_path(x) == 2*x. No RNG masks are implemented.
        x1 = yx + yx
        y1 = xy + xy

        # --- MLP residual branches --------------------------------------------
        f1 = 8 * C
        hx = _gelu_tanh(
            jnp.dot(_layernorm(x1, g21, be21), w_in_ref[:, f1:f1 + Hm],
                    preferred_element_type=f32) + b_fc1_1)
        x_out = x1 + jnp.dot(hx, w_fc2_ref[:, :C],
                             preferred_element_type=f32) + b_fc2_1

        hy = _gelu_tanh(
            jnp.dot(_layernorm(y1, g22, be22), w_in_ref[:, f1 + Hm:f1 + 2 * Hm],
                    preferred_element_type=f32) + b_fc1_2)
        y_out = y1 + jnp.dot(hy, w_fc2_ref[:, C:],
                             preferred_element_type=f32) + b_fc2_2

        # Output array is the lane-dense x||y packing (one HBM write per block).
        out_ref[:, :C] = x_out.astype(out_ref.dtype)
        out_ref[:, C:] = y_out.astype(out_ref.dtype)

    return kernel


def cross_block_forward(x, y, params, num_heads):
    """x, y: (B, N, C) float32. Returns (x_out, y_out), each (B, N, C)."""
    B, N, C = x.shape
    assert C % num_heads == 0
    Hm = params["w_fc1_1"].shape[1]
    hd = C // num_heads
    scale = float(hd) ** -0.5
    W = max(Hm, C)

    # ---- pack parameters into 3 slabs (cuts 22 tiny DMAs down to 3) ----------
    w_in = jnp.concatenate(
        [params["w_qkv_x"], params["w_qkv_y"],
         params["w_proj_y"], params["w_proj_x"],
         params["w_fc1_1"], params["w_fc1_2"]], axis=1)          # (C, 8C + 2Hm)
    w_fc2 = jnp.concatenate([params["w_fc2_1"], params["w_fc2_2"]], axis=1)  # (Hm, 2C)

    def _row(v):
        return jnp.zeros((W,), jnp.float32).at[: v.shape[0]].set(v)

    vec_rows = [params[k] for k in
                ("g11", "b11", "g12", "b12", "g21", "b21", "g22", "b22",
                 "b_proj_y", "b_proj_x", "b_fc2_1", "b_fc2_2",
                 "b_fc1_1", "b_fc1_2")]
    vec = jnp.stack([_row(v) for v in vec_rows]
                    + [jnp.zeros((W,), jnp.float32)] * 2)        # (16, W)

    # ---- lane-dense activation packing: one input DMA / one output DMA -------
    xy_in = jnp.concatenate([x, y], axis=-1)                     # (B, N, 2C)

    kernel = _make_cross_block_kernel(C, num_heads, Hm, scale)

    # Grid over batch; weights stay resident (index_map -> (0, 0)).
    # NOTE: for large realistic batches, widen the batch tile / keep this grid —
    # "parallel" lets v7x's 2 TensorCores split it; no-op on v5e/v6e.
    out = pl.pallas_call(
        kernel,
        out_shape=jax.ShapeDtypeStruct((B, N, 2 * C), jnp.float32),
        grid_spec=pltpu.PrefetchScalarGridSpec(
            num_scalar_prefetch=0,
            grid=(B,),
            in_specs=[
                pl.BlockSpec((None, N, 2 * C), lambda b: (b, 0, 0)),   # x||y
                pl.BlockSpec((16, W), lambda b: (0, 0)),               # 1-D params
                pl.BlockSpec((C, 8 * C + 2 * Hm), lambda b: (0, 0)),   # C-row weights
                pl.BlockSpec((Hm, 2 * C), lambda b: (0, 0)),           # fc2 weights
            ],
            out_specs=pl.BlockSpec((None, N, 2 * C), lambda b: (b, 0, 0)),
        ),
        compiler_params=pltpu.CompilerParams(
            dimension_semantics=("parallel",)),
    )(xy_in, vec, w_in, w_fc2)

    return out[..., :C], out[..., C:]


def init_params(key, dim, mlp_ratio=4.0):
    """All Linear weights stored transposed as (in_features, out_features)."""
    hm = int(dim * mlp_ratio)
    ks = jax.random.split(key, 8)

    def linear(k, fan_in, fan_out, bias=True):
        kw, kb = jax.random.split(k)
        bound = float(fan_in) ** -0.5           # PyTorch nn.Linear default init
        w = jax.random.uniform(kw, (fan_in, fan_out), jnp.float32, -bound, bound)
        b = (jax.random.uniform(kb, (fan_out,), jnp.float32, -bound, bound)
             if bias else jnp.zeros((fan_out,), jnp.float32))
        return w, b

    w_qkv_x, _ = linear(ks[0], dim, 3 * dim, bias=False)   # qkv_bias=False
    w_qkv_y, _ = linear(ks[1], dim, 3 * dim, bias=False)
    w_proj_x, b_proj_x = linear(ks[2], dim, dim)
    w_proj_y, b_proj_y = linear(ks[3], dim, dim)
    w_fc1_1, b_fc1_1 = linear(ks[4], dim, hm)
    w_fc2_1, b_fc2_1 = linear(ks[5], hm, dim)
    w_fc1_2, b_fc1_2 = linear(ks[6], dim, hm)
    w_fc2_2, b_fc2_2 = linear(ks[7], hm, dim)

    ones = jnp.ones((dim,), jnp.float32)
    zeros = jnp.zeros((dim,), jnp.float32)
    return {
        "w_qkv_x": w_qkv_x, "w_qkv_y": w_qkv_y,
        "w_proj_x": w_proj_x, "b_proj_x": b_proj_x,
        "w_proj_y": w_proj_y, "b_proj_y": b_proj_y,
        "w_fc1_1": w_fc1_1, "b_fc1_1": b_fc1_1,
        "w_fc2_1": w_fc2_1, "b_fc2_1": b_fc2_1,
        "w_fc1_2": w_fc1_2, "b_fc1_2": b_fc1_2,
        "w_fc2_2": w_fc2_2, "b_fc2_2": b_fc2_2,
        "g11": ones, "b11": zeros, "g12": ones, "b12": zeros,
        "g21": ones, "b21": zeros, "g22": ones, "b22": zeros,
    }


def ref_cross_block(x, y, p, num_heads):
    """Pure-JAX reference mirroring the PyTorch module (eval mode)."""
    C = x.shape[-1]
    hd = C // num_heads
    scale = float(hd) ** -0.5

    def ln(v, g, b, eps=1e-5):
        mu = jnp.mean(v, axis=-1, keepdims=True)
        var = jnp.mean((v - mu) ** 2, axis=-1, keepdims=True)
        return (v - mu) * jax.lax.rsqrt(var + eps) * g + b

    def to_heads(t):   # (B, N, C) -> (B, H, N, hd)
        B, N, _ = t.shape
        return t.reshape(B, N, num_heads, hd).transpose(0, 2, 1, 3)

    def from_heads(t):  # (B, H, N, hd) -> (B, N, C)
        B, H, N, _ = t.shape
        return t.transpose(0, 2, 1, 3).reshape(B, N, C)

    xn = ln(x, p["g11"], p["b11"])
    yn = ln(y, p["g12"], p["b12"])
    qkv_x = xn @ p["w_qkv_x"]
    qkv_y = yn @ p["w_qkv_y"]
    q_x, k_x, v_x = (to_heads(t) for t in jnp.split(qkv_x, 3, axis=-1))
    q_y, k_y, v_y = (to_heads(t) for t in jnp.split(qkv_y, 3, axis=-1))

    a_xy = jax.nn.softmax(q_x @ jnp.swapaxes(k_y, -1, -2) * scale, axis=-1)
    xy = from_heads(a_xy @ v_y) @ p["w_proj_y"] + p["b_proj_y"]
    a_yx = jax.nn.softmax(q_y @ jnp.swapaxes(k_x, -1, -2) * scale, axis=-1)
    yx = from_heads(a_yx @ v_x) @ p["w_proj_x"] + p["b_proj_x"]

    x1 = yx + yx
    y1 = xy + xy

    def mlp(v, w1, b1, w2, b2):
        return _gelu_tanh(v @ w1 + b1) @ w2 + b2

    x_out = x1 + mlp(ln(x1, p["g21"], p["b21"]),
                     p["w_fc1_1"], p["b_fc1_1"], p["w_fc2_1"], p["b_fc2_1"])
    y_out = y1 + mlp(ln(y1, p["g22"], p["b22"]),
                     p["w_fc1_2"], p["b_fc1_2"], p["w_fc2_2"], p["b_fc2_2"])
    return x_out, y_out


if __name__ == "__main__":
    key = jax.random.PRNGKey(0)
    kx, ky, kp = jax.random.split(key, 3)

    batch, seq, dim, num_heads = 2, 8, 32, 4
    x = jax.random.normal(kx, (batch, seq, dim), jnp.float32)
    y = jax.random.normal(ky, (batch, seq, dim), jnp.float32)
    params = init_params(kp, dim, mlp_ratio=4.0)

    x_out, y_out = cross_block_forward(x, y, params, num_heads)
    jax.block_until_ready((x_out, y_out))

    with jax.default_matmul_precision("highest"):
        x_ref, y_ref = ref_cross_block(x, y, params, num_heads)

    assert x_out.shape == (batch, seq, dim) and y_out.shape == (batch, seq, dim)
    assert jnp.allclose(x_out, x_ref, atol=2e-4, rtol=2e-4), \
        float(jnp.max(jnp.abs(x_out - x_ref)))
    assert jnp.allclose(y_out, y_ref, atol=2e-4, rtol=2e-4), \
        float(jnp.max(jnp.abs(y_out - y_ref)))

    print("KERNEL_OK")
</pallas_src>

<mosaic_0001>
module attributes {stable_mosaic.version = 11 : i64} {
  func.func @kernel(%arg0: i32, %arg1: memref<1x8x64xf32, #tpu.memory_space<vmem>>, %arg2: memref<16x128xf32, #tpu.memory_space<vmem>>, %arg3: memref<32x512xf32, #tpu.memory_space<vmem>>, %arg4: memref<128x64xf32, #tpu.memory_space<vmem>>, %arg5: memref<1x8x64xf32, #tpu.memory_space<vmem>>) attributes {dimension_semantics = [#tpu.dimension_semantics<parallel>], iteration_bounds = array<i64: 2>, scalar_prefetch = 0 : i64, scratch_operands = 0 : i64, tpu.core_type = #tpu.core_type<tc>, window_params = [{transform_indices = @transform_0, window_bounds = array<i64: 1, 8, 64>}, {pipeline_mode = #tpu.pipeline_mode<synchronous>, transform_indices = @transform_1, window_bounds = array<i64: 16, 128>}, {pipeline_mode = #tpu.pipeline_mode<synchronous>, transform_indices = @transform_2, window_bounds = array<i64: 32, 512>}, {pipeline_mode = #tpu.pipeline_mode<synchronous>, transform_indices = @transform_3, window_bounds = array<i64: 128, 64>}, {transform_indices = @transform_4, window_bounds = array<i64: 1, 8, 64>}]} {
    %c0 = arith.constant 0 : index
    %c0_0 = arith.constant 0 : index
    %c0_1 = arith.constant 0 : index
    %0 = vector.load %arg1[%c0, %c0_0, %c0_1] : memref<1x8x64xf32, #tpu.memory_space<vmem>>, vector<1x8x64xf32>
    %1 = vector.shape_cast %0 : vector<1x8x64xf32> to vector<8x64xf32>
    %2 = vector.extract_strided_slice %1 {offsets = [0, 0], sizes = [8, 32], strides = [1, 1]} : vector<8x64xf32> to vector<8x32xf32>
    %3 = vector.extract_strided_slice %1 {offsets = [0, 32], sizes = [8, 32], strides = [1, 1]} : vector<8x64xf32> to vector<8x32xf32>
    %c0_2 = arith.constant 0 : index
    %c0_3 = arith.constant 0 : index
    %4 = vector.load %arg2[%c0_2, %c0_3] : memref<16x128xf32, #tpu.memory_space<vmem>>, vector<1x32xf32>
    %c1 = arith.constant 1 : index
    %c0_4 = arith.constant 0 : index
    %5 = vector.load %arg2[%c1, %c0_4] : memref<16x128xf32, #tpu.memory_space<vmem>>, vector<1x32xf32>
    %c2 = arith.constant 2 : index
    %c0_5 = arith.constant 0 : index
    %6 = vector.load %arg2[%c2, %c0_5] : memref<16x128xf32, #tpu.memory_space<vmem>>, vector<1x32xf32>
    %c3 = arith.constant 3 : index
    %c0_6 = arith.constant 0 : index
    %7 = vector.load %arg2[%c3, %c0_6] : memref<16x128xf32, #tpu.memory_space<vmem>>, vector<1x32xf32>
    %c4 = arith.constant 4 : index
    %c0_7 = arith.constant 0 : index
    %8 = vector.load %arg2[%c4, %c0_7] : memref<16x128xf32, #tpu.memory_space<vmem>>, vector<1x32xf32>
    %c5 = arith.constant 5 : index
    %c0_8 = arith.constant 0 : index
    %9 = vector.load %arg2[%c5, %c0_8] : memref<16x128xf32, #tpu.memory_space<vmem>>, vector<1x32xf32>
    %c6 = arith.constant 6 : index
    %c0_9 = arith.constant 0 : index
    %10 = vector.load %arg2[%c6, %c0_9] : memref<16x128xf32, #tpu.memory_space<vmem>>, vector<1x32xf32>
    %c7 = arith.constant 7 : index
    %c0_10 = arith.constant 0 : index
    %11 = vector.load %arg2[%c7, %c0_10] : memref<16x128xf32, #tpu.memory_space<vmem>>, vector<1x32xf32>
    %c8 = arith.constant 8 : index
    %c0_11 = arith.constant 0 : index
    %12 = vector.load %arg2[%c8, %c0_11] : memref<16x128xf32, #tpu.memory_space<vmem>>, vector<1x32xf32>
    %c9 = arith.constant 9 : index
    %c0_12 = arith.constant 0 : index
    %13 = vector.load %arg2[%c9, %c0_12] : memref<16x128xf32, #tpu.memory_space<vmem>>, vector<1x32xf32>
    %c10 = arith.constant 10 : index
    %c0_13 = arith.constant 0 : index
    %14 = vector.load %arg2[%c10, %c0_13] : memref<16x128xf32, #tpu.memory_space<vmem>>, vector<1x32xf32>
    %c11 = arith.constant 11 : index
    %c0_14 = arith.constant 0 : index
    %15 = vector.load %arg2[%c11, %c0_14] : memref<16x128xf32, #tpu.memory_space<vmem>>, vector<1x32xf32>
    %c12 = arith.constant 12 : index
    %c0_15 = arith.constant 0 : index
    %16 = vector.load %arg2[%c12, %c0_15] : memref<16x128xf32, #tpu.memory_space<vmem>>, vector<1x128xf32>
    %c13 = arith.constant 13 : index
    %c0_16 = arith.constant 0 : index
    %17 = vector.load %arg2[%c13, %c0_16] : memref<16x128xf32, #tpu.memory_space<vmem>>, vector<1x128xf32>
    %cst = arith.constant dense<0.000000e+00> : vector<8xf32>
    %18 = vector.multi_reduction <add>, %2, %cst [1] : vector<8x32xf32> to vector<8xf32>
    %19 = vector.shape_cast %18 : vector<8xf32> to vector<8x1xf32>
    %20 = arith.mulf %2, %2 : vector<8x32xf32>
    %cst_17 = arith.constant dense<0.000000e+00> : vector<8xf32>
    %21 = vector.multi_reduction <add>, %20, %cst_17 [1] : vector<8x32xf32> to vector<8xf32>
    %22 = vector.shape_cast %21 : vector<8xf32> to vector<8x1xf32>
    %cst_18 = arith.constant 3.125000e-02 : f32
    %23 = vector.broadcast %cst_18 : f32 to vector<8x1xf32>
    %24 = arith.mulf %19, %23 : vector<8x1xf32>
    %cst_19 = arith.constant 3.125000e-02 : f32
    %25 = vector.broadcast %cst_19 : f32 to vector<8x1xf32>
    %26 = arith.mulf %22, %25 : vector<8x1xf32>
    %27 = arith.mulf %24, %24 : vector<8x1xf32>
    %28 = arith.subf %26, %27 : vector<8x1xf32>
    %cst_20 = arith.constant 9.99999974E-6 : f32
    %29 = vector.broadcast %cst_20 : f32 to vector<8x1xf32>
    %30 = arith.addf %28, %29 : vector<8x1xf32>
    %31 = math.rsqrt %30 : vector<8x1xf32>
    %32 = vector.broadcast %24 : vector<8x1xf32> to vector<8x32xf32>
    %33 = arith.subf %2, %32 : vector<8x32xf32>
    %34 = vector.broadcast %31 : vector<8x1xf32> to vector<8x32xf32>
    %35 = arith.mulf %33, %34 : vector<8x32xf32>
    %36 = vector.broadcast %4 : vector<1x32xf32> to vector<8x32xf32>
    %37 = arith.mulf %35, %36 : vector<8x32xf32>
    %38 = vector.broadcast %5 : vector<1x32xf32> to vector<8x32xf32>
    %39 = arith.addf %37, %38 : vector<8x32xf32>
    %cst_21 = arith.constant dense<0.000000e+00> : vector<8xf32>
    %40 = vector.multi_reduction <add>, %3, %cst_21 [1] : vector<8x32xf32> to vector<8xf32>
    %41 = vector.shape_cast %40 : vector<8xf32> to vector<8x1xf32>
    %42 = arith.mulf %3, %3 : vector<8x32xf32>
    %cst_22 = arith.constant dense<0.000000e+00> : vector<8xf32>
    %43 = vector.multi_reduction <add>, %42, %cst_22 [1] : vector<8x32xf32> to vector<8xf32>
    %44 = vector.shape_cast %43 : vector<8xf32> to vector<8x1xf32>
    %cst_23 = arith.constant 3.125000e-02 : f32
    %45 = vector.broadcast %cst_23 : f32 to vector<8x1xf32>
    %46 = arith.mulf %41, %45 : vector<8x1xf32>
    %cst_24 = arith.constant 3.125000e-02 : f32
    %47 = vector.broadcast %cst_24 : f32 to vector<8x1xf32>
    %48 = arith.mulf %44, %47 : vector<8x1xf32>
    %49 = arith.mulf %46, %46 : vector<8x1xf32>
    %50 = arith.subf %48, %49 : vector<8x1xf32>
    %cst_25 = arith.constant 9.99999974E-6 : f32
    %51 = vector.broadcast %cst_25 : f32 to vector<8x1xf32>
    %52 = arith.addf %50, %51 : vector<8x1xf32>
    %53 = math.rsqrt %52 : vector<8x1xf32>
    %54 = vector.broadcast %46 : vector<8x1xf32> to vector<8x32xf32>
    %55 = arith.subf %3, %54 : vector<8x32xf32>
    %56 = vector.broadcast %53 : vector<8x1xf32> to vector<8x32xf32>
    %57 = arith.mulf %55, %56 : vector<8x32xf32>
    %58 = vector.broadcast %6 : vector<1x32xf32> to vector<8x32xf32>
    %59 = arith.mulf %57, %58 : vector<8x32xf32>
    %60 = vector.broadcast %7 : vector<1x32xf32> to vector<8x32xf32>
    %61 = arith.addf %59, %60 : vector<8x32xf32>
    %c0_26 = arith.constant 0 : index
    %c0_27 = arith.constant 0 : index
    %62 = vector.load %arg3[%c0_26, %c0_27] : memref<32x512xf32, #tpu.memory_space<vmem>>, vector<32x96xf32>
    %cst_28 = arith.constant dense<0.000000e+00> : vector<8x96xf32>
    %63 = tpu.matmul %39, %62, %cst_28 {dimension_numbers = #tpu.dot_dimension_numbers<[1], [0], [0], [1], [0, 0, 1, 1], [], []>} : vector<8x32xf32>, vector<32x96xf32>, vector<8x96xf32> -> vector<8x96xf32>
    %c0_29 = arith.constant 0 : index
    %c96 = arith.constant 96 : index
    %64 = vector.load %arg3[%c0_29, %c96] : memref<32x512xf32, #tpu.memory_space<vmem>>, vector<32x96xf32>
    %cst_30 = arith.constant dense<0.000000e+00> : vector<8x96xf32>
    %65 = tpu.matmul %61, %64, %cst_30 {dimension_numbers = #tpu.dot_dimension_numbers<[1], [0], [0], [1], [0, 0, 1, 1], [], []>} : vector<8x32xf32>, vector<32x96xf32>, vector<8x96xf32> -> vector<8x96xf32>
    %66 = vector.extract_strided_slice %63 {offsets = [0, 0], sizes = [8, 32], strides = [1, 1]} : vector<8x96xf32> to vector<8x32xf32>
    %67 = vector.extract_strided_slice %63 {offsets = [0, 32], sizes = [8, 32], strides = [1, 1]} : vector<8x96xf32> to vector<8x32xf32>
    %68 = vector.extract_strided_slice %63 {offsets = [0, 64], sizes = [8, 32], strides = [1, 1]} : vector<8x96xf32> to vector<8x32xf32>
    %69 = vector.extract_strided_slice %65 {offsets = [0, 0], sizes = [8, 32], strides = [1, 1]} : vector<8x96xf32> to vector<8x32xf32>
    %70 = vector.extract_strided_slice %65 {offsets = [0, 32], sizes = [8, 32], strides = [1, 1]} : vector<8x96xf32> to vector<8x32xf32>
    %71 = vector.extract_strided_slice %65 {offsets = [0, 64], sizes = [8, 32], strides = [1, 1]} : vector<8x96xf32> to vector<8x32xf32>
    %c0_31 = arith.constant 0 : index
    %c192 = arith.constant 192 : index
    %72 = vector.load %arg3[%c0_31, %c192] : memref<32x512xf32, #tpu.memory_space<vmem>>, vector<32x32xf32>
    %c0_32 = arith.constant 0 : index
    %c224 = arith.constant 224 : index
    %73 = vector.load %arg3[%c0_32, %c224] : memref<32x512xf32, #tpu.memory_space<vmem>>, vector<32x32xf32>
    %74 = vector.extract_strided_slice %66 {offsets = [0, 0], sizes = [8, 8], strides = [1, 1]} : vector<8x32xf32> to vector<8x8xf32>
    %75 = vector.extract_strided_slice %70 {offsets = [0, 0], sizes = [8, 8], strides = [1, 1]} : vector<8x32xf32> to vector<8x8xf32>
    %76 = vector.extract_strided_slice %71 {offsets = [0, 0], sizes = [8, 8], strides = [1, 1]} : vector<8x32xf32> to vector<8x8xf32>
    %cst_33 = arith.constant dense<0.000000e+00> : vector<8x8xf32>
    %77 = tpu.matmul %74, %75, %cst_33 {dimension_numbers = #tpu.dot_dimension_numbers<[1], [1], [0], [0], [0, 0, 1, 0], [], []>} : vector<8x8xf32>, vector<8x8xf32>, vector<8x8xf32> -> vector<8x8xf32>
    %cst_34 = arith.constant 0.353553385 : f32
    %78 = vector.broadcast %cst_34 : f32 to vector<8x8xf32>
    %79 = arith.mulf %77, %78 : vector<8x8xf32>
    %cst_35 = arith.constant dense<0xFF800000> : vector<8xf32>
    %80 = vector.multi_reduction <maximumf>, %79, %cst_35 [1] : vector<8x8xf32> to vector<8xf32>
    %81 = vector.shape_cast %80 : vector<8xf32> to vector<8x1xf32>
    %82 = vector.broadcast %81 : vector<8x1xf32> to vector<8x8xf32>
    %83 = arith.subf %79, %82 : vector<8x8xf32>
    %84 = math.exp %83 : vector<8x8xf32>
    %cst_36 = arith.constant dense<0.000000e+00> : vector<8xf32>
    %85 = vector.multi_reduction <add>, %84, %cst_36 [1] : vector<8x8xf32> to vector<8xf32>
    %86 = vector.shape_cast %85 : vector<8xf32> to vector<8x1xf32>
    %87 = vector.broadcast %86 : vector<8x1xf32> to vector<8x8xf32>
    %88 = arith.divf %84, %87 : vector<8x8xf32>
    %cst_37 = arith.constant dense<0.000000e+00> : vector<8x8xf32>
    %89 = tpu.matmul %88, %76, %cst_37 {dimension_numbers = #tpu.dot_dimension_numbers<[1], [0], [0], [1], [0, 0, 1, 1], [], []>} : vector<8x8xf32>, vector<8x8xf32>, vector<8x8xf32> -> vector<8x8xf32>
    %90 = vector.extract_strided_slice %72 {offsets = [0, 0], sizes = [8, 32], strides = [1, 1]} : vector<32x32xf32> to vector<8x32xf32>
    %cst_38 = arith.constant dense<0.000000e+00> : vector<8x32xf32>
    %91 = tpu.matmul %89, %90, %cst_38 {dimension_numbers = #tpu.dot_dimension_numbers<[1], [0], [0], [1], [0, 0, 1, 1], [], []>} : vector<8x8xf32>, vector<8x32xf32>, vector<8x32xf32> -> vector<8x32xf32>
    %92 = vector.extract_strided_slice %66 {offsets = [0, 8], sizes = [8, 8], strides = [1, 1]} : vector<8x32xf32> to vector<8x8xf32>
    %93 = vector.extract_strided_slice %70 {offsets = [0, 8], sizes = [8, 8], strides = [1, 1]} : vector<8x32xf32> to vector<8x8xf32>
    %94 = vector.extract_strided_slice %71 {offsets = [0, 8], sizes = [8, 8], strides = [1, 1]} : vector<8x32xf32> to vector<8x8xf32>
    %cst_39 = arith.constant dense<0.000000e+00> : vector<8x8xf32>
    %95 = tpu.matmul %92, %93, %cst_39 {dimension_numbers = #tpu.dot_dimension_numbers<[1], [1], [0], [0], [0, 0, 1, 0], [], []>} : vector<8x8xf32>, vector<8x8xf32>, vector<8x8xf32> -> vector<8x8xf32>
    %cst_40 = arith.constant 0.353553385 : f32
    %96 = vector.broadcast %cst_40 : f32 to vector<8x8xf32>
    %97 = arith.mulf %95, %96 : vector<8x8xf32>
    %cst_41 = arith.constant dense<0xFF800000> : vector<8xf32>
    %98 = vector.multi_reduction <maximumf>, %97, %cst_41 [1] : vector<8x8xf32> to vector<8xf32>
    %99 = vector.shape_cast %98 : vector<8xf32> to vector<8x1xf32>
    %100 = vector.broadcast %99 : vector<8x1xf32> to vector<8x8xf32>
    %101 = arith.subf %97, %100 : vector<8x8xf32>
    %102 = math.exp %101 : vector<8x8xf32>
    %cst_42 = arith.constant dense<0.000000e+00> : vector<8xf32>
    %103 = vector.multi_reduction <add>, %102, %cst_42 [1] : vector<8x8xf32> to vector<8xf32>
    %104 = vector.shape_cast %103 : vector<8xf32> to vector<8x1xf32>
    %105 = vector.broadcast %104 : vector<8x1xf32> to vector<8x8xf32>
    %106 = arith.divf %102, %105 : vector<8x8xf32>
    %cst_43 = arith.constant dense<0.000000e+00> : vector<8x8xf32>
    %107 = tpu.matmul %106, %94, %cst_43 {dimension_numbers = #tpu.dot_dimension_numbers<[1], [0], [0], [1], [0, 0, 1, 1], [], []>} : vector<8x8xf32>, vector<8x8xf32>, vector<8x8xf32> -> vector<8x8xf32>
    %108 = vector.extract_strided_slice %72 {offsets = [8, 0], sizes = [8, 32], strides = [1, 1]} : vector<32x32xf32> to vector<8x32xf32>
    %cst_44 = arith.constant dense<0.000000e+00> : vector<8x32xf32>
    %109 = tpu.matmul %107, %108, %cst_44 {dimension_numbers = #tpu.dot_dimension_numbers<[1], [0], [0], [1], [0, 0, 1, 1], [], []>} : vector<8x8xf32>, vector<8x32xf32>, vector<8x32xf32> -> vector<8x32xf32>
    %110 = arith.addf %91, %109 : vector<8x32xf32>
    %111 = vector.extract_strided_slice %66 {offsets = [0, 16], sizes = [8, 8], strides = [1, 1]} : vector<8x32xf32> to vector<8x8xf32>
    %112 = vector.extract_strided_slice %70 {offsets = [0, 16], sizes = [8, 8], strides = [1, 1]} : vector<8x32xf32> to vector<8x8xf32>
    %113 = vector.extract_strided_slice %71 {offsets = [0, 16], sizes = [8, 8], strides = [1, 1]} : vector<8x32xf32> to vector<8x8xf32>
    %cst_45 = arith.constant dense<0.000000e+00> : vector<8x8xf32>
    %114 = tpu.matmul %111, %112, %cst_45 {dimension_numbers = #tpu.dot_dimension_numbers<[1], [1], [0], [0], [0, 0, 1, 0], [], []>} : vector<8x8xf32>, vector<8x8xf32>, vector<8x8xf32> -> vector<8x8xf32>
    %cst_46 = arith.constant 0.353553385 : f32
    %115 = vector.broadcast %cst_46 : f32 to vector<8x8xf32>
    %116 = arith.mulf %114, %115 : vector<8x8xf32>
    %cst_47 = arith.constant dense<0xFF800000> : vector<8xf32>
    %117 = vector.multi_reduction <maximumf>, %116, %cst_47 [1] : vector<8x8xf32> to vector<8xf32>
    %118 = vector.shape_cast %117 : vector<8xf32> to vector<8x1xf32>
    %119 = vector.broadcast %118 : vector<8x1xf32> to vector<8x8xf32>
    %120 = arith.subf %116, %119 : vector<8x8xf32>
    %121 = math.exp %120 : vector<8x8xf32>
    %cst_48 = arith.constant dense<0.000000e+00> : vector<8xf32>
    %122 = vector.multi_reduction <add>, %121, %cst_48 [1] : vector<8x8xf32> to vector<8xf32>
    %123 = vector.shape_cast %122 : vector<8xf32> to vector<8x1xf32>
    %124 = vector.broadcast %123 : vector<8x1xf32> to vector<8x8xf32>
    %125 = arith.divf %121, %124 : vector<8x8xf32>
    %cst_49 = arith.constant dense<0.000000e+00> : vector<8x8xf32>
    %126 = tpu.matmul %125, %113, %cst_49 {dimension_numbers = #tpu.dot_dimension_numbers<[1], [0], [0], [1], [0, 0, 1, 1], [], []>} : vector<8x8xf32>, vector<8x8xf32>, vector<8x8xf32> -> vector<8x8xf32>
    %127 = vector.extract_strided_slice %72 {offsets = [16, 0], sizes = [8, 32], strides = [1, 1]} : vector<32x32xf32> to vector<8x32xf32>
    %cst_50 = arith.constant dense<0.000000e+00> : vector<8x32xf32>
    %128 = tpu.matmul %126, %127, %cst_50 {dimension_numbers = #tpu.dot_dimension_numbers<[1], [0], [0], [1], [0, 0, 1, 1], [], []>} : vector<8x8xf32>, vector<8x32xf32>, vector<8x32xf32> -> vector<8x32xf32>
    %129 = arith.addf %110, %128 : vector<8x32xf32>
    %130 = vector.extract_strided_slice %66 {offsets = [0, 24], sizes = [8, 8], strides = [1, 1]} : vector<8x32xf32> to vector<8x8xf32>
    %131 = vector.extract_strided_slice %70 {offsets = [0, 24], sizes = [8, 8], strides = [1, 1]} : vector<8x32xf32> to vector<8x8xf32>
    %132 = vector.extract_strided_slice %71 {offsets = [0, 24], sizes = [8, 8], strides = [1, 1]} : vector<8x32xf32> to vector<8x8xf32>
    %cst_51 = arith.constant dense<0.000000e+00> : vector<8x8xf32>
    %133 = tpu.matmul %130, %131, %cst_51 {dimension_numbers = #tpu.dot_dimension_numbers<[1], [1], [0], [0], [0, 0, 1, 0], [], []>} : vector<8x8xf32>, vector<8x8xf32>, vector<8x8xf32> -> vector<8x8xf32>
    %cst_52 = arith.constant 0.353553385 : f32
    %134 = vector.broadcast %cst_52 : f32 to vector<8x8xf32>
    %135 = arith.mulf %133, %134 : vector<8x8xf32>
    %cst_53 = arith.constant dense<0xFF800000> : vector<8xf32>
    %136 = vector.multi_reduction <maximumf>, %135, %cst_53 [1] : vector<8x8xf32> to vector<8xf32>
    %137 = vector.shape_cast %136 : vector<8xf32> to vector<8x1xf32>
    %138 = vector.broadcast %137 : vector<8x1xf32> to vector<8x8xf32>
    %139 = arith.subf %135, %138 : vector<8x8xf32>
    %140 = math.exp %139 : vector<8x8xf32>
    %cst_54 = arith.constant dense<0.000000e+00> : vector<8xf32>
    %141 = vector.multi_reduction <add>, %140, %cst_54 [1] : vector<8x8xf32> to vector<8xf32>
    %142 = vector.shape_cast %141 : vector<8xf32> to vector<8x1xf32>
    %143 = vector.broadcast %142 : vector<8x1xf32> to vector<8x8xf32>
    %144 = arith.divf %140, %143 : vector<8x8xf32>
    %cst_55 = arith.constant dense<0.000000e+00> : vector<8x8xf32>
    %145 = tpu.matmul %144, %132, %cst_55 {dimension_numbers = #tpu.dot_dimension_numbers<[1], [0], [0], [1], [0, 0, 1, 1], [], []>} : vector<8x8xf32>, vector<8x8xf32>, vector<8x8xf32> -> vector<8x8xf32>
    %146 = vector.extract_strided_slice %72 {offsets = [24, 0], sizes = [8, 32], strides = [1, 1]} : vector<32x32xf32> to vector<8x32xf32>
    %cst_56 = arith.constant dense<0.000000e+00> : vector<8x32xf32>
    %147 = tpu.matmul %145, %146, %cst_56 {dimension_numbers = #tpu.dot_dimension_numbers<[1], [0], [0], [1], [0, 0, 1, 1], [], []>} : vector<8x8xf32>, vector<8x32xf32>, vector<8x32xf32> -> vector<8x32xf32>
    %148 = arith.addf %129, %147 : vector<8x32xf32>
    %149 = vector.broadcast %12 : vector<1x32xf32> to vector<8x32xf32>
    %150 = arith.addf %148, %149 : vector<8x32xf32>
    %151 = vector.extract_strided_slice %69 {offsets = [0, 0], sizes = [8, 8], strides = [1, 1]} : vector<8x32xf32> to vector<8x8xf32>
    %152 = vector.extract_strided_slice %67 {offsets = [0, 0], sizes = [8, 8], strides = [1, 1]} : vector<8x32xf32> to vector<8x8xf32>
    %153 = vector.extract_strided_slice %68 {offsets = [0, 0], sizes = [8, 8], strides = [1, 1]} : vector<8x32xf32> to vector<8x8xf32>
    %cst_57 = arith.constant dense<0.000000e+00> : vector<8x8xf32>
    %154 = tpu.matmul %151, %152, %cst_57 {dimension_numbers = #tpu.dot_dimension_numbers<[1], [1], [0], [0], [0, 0, 1, 0], [], []>} : vector<8x8xf32>, vector<8x8xf32>, vector<8x8xf32> -> vector<8x8xf32>
    %cst_58 = arith.constant 0.353553385 : f32
    %155 = vector.broadcast %cst_58 : f32 to vector<8x8xf32>
    %156 = arith.mulf %154, %155 : vector<8x8xf32>
    %cst_59 = arith.constant dense<0xFF800000> : vector<8xf32>
    %157 = vector.multi_reduction <maximumf>, %156, %cst_59 [1] : vector<8x8xf32> to vector<8xf32>
    %158 = vector.shape_cast %157 : vector<8xf32> to vector<8x1xf32>
    %159 = vector.broadcast %158 : vector<8x1xf32> to vector<8x8xf32>
    %160 = arith.subf %156, %159 : vector<8x8xf32>
    %161 = math.exp %160 : vector<8x8xf32>
    %cst_60 = arith.constant dense<0.000000e+00> : vector<8xf32>
    %162 = vector.multi_reduction <add>, %161, %cst_60 [1] : vector<8x8xf32> to vector<8xf32>
    %163 = vector.shape_cast %162 : vector<8xf32> to vector<8x1xf32>
    %164 = vector.broadcast %163 : vector<8x1xf32> to vector<8x8xf32>
    %165 = arith.divf %161, %164 : vector<8x8xf32>
    %cst_61 = arith.constant dense<0.000000e+00> : vector<8x8xf32>
    %166 = tpu.matmul %165, %153, %cst_61 {dimension_numbers = #tpu.dot_dimension_numbers<[1], [0], [0], [1], [0, 0, 1, 1], [], []>} : vector<8x8xf32>, vector<8x8xf32>, vector<8x8xf32> -> vector<8x8xf32>
    %167 = vector.extract_strided_slice %73 {offsets = [0, 0], sizes = [8, 32], strides = [1, 1]} : vector<32x32xf32> to vector<8x32xf32>
    %cst_62 = arith.constant dense<0.000000e+00> : vector<8x32xf32>
    %168 = tpu.matmul %166, %167, %cst_62 {dimension_numbers = #tpu.dot_dimension_numbers<[1], [0], [0], [1], [0, 0, 1, 1], [], []>} : vector<8x8xf32>, vector<8x32xf32>, vector<8x32xf32> -> vector<8x32xf32>
    %169 = vector.extract_strided_slice %69 {offsets = [0, 8], sizes = [8, 8], strides = [1, 1]} : vector<8x32xf32> to vector<8x8xf32>
    %170 = vector.extract_strided_slice %67 {offsets = [0, 8], sizes = [8, 8], strides = [1, 1]} : vector<8x32xf32> to vector<8x8xf32>
    %171 = vector.extract_strided_slice %68 {offsets = [0, 8], sizes = [8, 8], strides = [1, 1]} : vector<8x32xf32> to vector<8x8xf32>
    %cst_63 = arith.constant dense<0.000000e+00> : vector<8x8xf32>
    %172 = tpu.matmul %169, %170, %cst_63 {dimension_numbers = #tpu.dot_dimension_numbers<[1], [1], [0], [0], [0, 0, 1, 0], [], []>} : vector<8x8xf32>, vector<8x8xf32>, vector<8x8xf32> -> vector<8x8xf32>
    %cst_64 = arith.constant 0.353553385 : f32
    %173 = vector.broadcast %cst_64 : f32 to vector<8x8xf32>
    %174 = arith.mulf %172, %173 : vector<8x8xf32>
    %cst_65 = arith.constant dense<0xFF800000> : vector<8xf32>
    %175 = vector.multi_reduction <maximumf>, %174, %cst_65 [1] : vector<8x8xf32> to vector<8xf32>
    %176 = vector.shape_cast %175 : vector<8xf32> to vector<8x1xf32>
    %177 = vector.broadcast %176 : vector<8x1xf32> to vector<8x8xf32>
    %178 = arith.subf %174, %177 : vector<8x8xf32>
    %179 = math.exp %178 : vector<8x8xf32>
    %cst_66 = arith.constant dense<0.000000e+00> : vector<8xf32>
    %180 = vector.multi_reduction <add>, %179, %cst_66 [1] : vector<8x8xf32> to vector<8xf32>
    %181 = vector.shape_cast %180 : vector<8xf32> to vector<8x1xf32>
    %182 = vector.broadcast %181 : vector<8x1xf32> to vector<8x8xf32>
    %183 = arith.divf %179, %182 : vector<8x8xf32>
    %cst_67 = arith.constant dense<0.000000e+00> : vector<8x8xf32>
    %184 = tpu.matmul %183, %171, %cst_67 {dimension_numbers = #tpu.dot_dimension_numbers<[1], [0], [0], [1], [0, 0, 1, 1], [], []>} : vector<8x8xf32>, vector<8x8xf32>, vector<8x8xf32> -> vector<8x8xf32>
    %185 = vector.extract_strided_slice %73 {offsets = [8, 0], sizes = [8, 32], strides = [1, 1]} : vector<32x32xf32> to vector<8x32xf32>
    %cst_68 = arith.constant dense<0.000000e+00> : vector<8x32xf32>
    %186 = tpu.matmul %184, %185, %cst_68 {dimension_numbers = #tpu.dot_dimension_numbers<[1], [0], [0], [1], [0, 0, 1, 1], [], []>} : vector<8x8xf32>, vector<8x32xf32>, vector<8x32xf32> -> vector<8x32xf32>
    %187 = arith.addf %168, %186 : vector<8x32xf32>
    %188 = vector.extract_strided_slice %69 {offsets = [0, 16], sizes = [8, 8], strides = [1, 1]} : vector<8x32xf32> to vector<8x8xf32>
    %189 = vector.extract_strided_slice %67 {offsets = [0, 16], sizes = [8, 8], strides = [1, 1]} : vector<8x32xf32> to vector<8x8xf32>
    %190 = vector.extract_strided_slice %68 {offsets = [0, 16], sizes = [8, 8], strides = [1, 1]} : vector<8x32xf32> to vector<8x8xf32>
    %cst_69 = arith.constant dense<0.000000e+00> : vector<8x8xf32>
    %191 = tpu.matmul %188, %189, %cst_69 {dimension_numbers = #tpu.dot_dimension_numbers<[1], [1], [0], [0], [0, 0, 1, 0], [], []>} : vector<8x8xf32>, vector<8x8xf32>, vector<8x8xf32> -> vector<8x8xf32>
    %cst_70 = arith.constant 0.353553385 : f32
    %192 = vector.broadcast %cst_70 : f32 to vector<8x8xf32>
    %193 = arith.mulf %191, %192 : vector<8x8xf32>
    %cst_71 = arith.constant dense<0xFF800000> : vector<8xf32>
    %194 = vector.multi_reduction <maximumf>, %193, %cst_71 [1] : vector<8x8xf32> to vector<8xf32>
    %195 = vector.shape_cast %194 : vector<8xf32> to vector<8x1xf32>
    %196 = vector.broadcast %195 : vector<8x1xf32> to vector<8x8xf32>
    %197 = arith.subf %193, %196 : vector<8x8xf32>
    %198 = math.exp %197 : vector<8x8xf32>
    %cst_72 = arith.constant dense<0.000000e+00> : vector<8xf32>
    %199 = vector.multi_reduction <add>, %198, %cst_72 [1] : vector<8x8xf32> to vector<8xf32>
    %200 = vector.shape_cast %199 : vector<8xf32> to vector<8x1xf32>
    %201 = vector.broadcast %200 : vector<8x1xf32> to vector<8x8xf32>
    %202 = arith.divf %198, %201 : vector<8x8xf32>
    %cst_73 = arith.constant dense<0.000000e+00> : vector<8x8xf32>
    %203 = tpu.matmul %202, %190, %cst_73 {dimension_numbers = #tpu.dot_dimension_numbers<[1], [0], [0], [1], [0, 0, 1, 1], [], []>} : vector<8x8xf32>, vector<8x8xf32>, vector<8x8xf32> -> vector<8x8xf32>
    %204 = vector.extract_strided_slice %73 {offsets = [16, 0], sizes = [8, 32], strides = [1, 1]} : vector<32x32xf32> to vector<8x32xf32>
    %cst_74 = arith.constant dense<0.000000e+00> : vector<8x32xf32>
    %205 = tpu.matmul %203, %204, %cst_74 {dimension_numbers = #tpu.dot_dimension_numbers<[1], [0], [0], [1], [0, 0, 1, 1], [], []>} : vector<8x8xf32>, vector<8x32xf32>, vector<8x32xf32> -> vector<8x32xf32>
    %206 = arith.addf %187, %205 : vector<8x32xf32>
    %207 = vector.extract_strided_slice %69 {offsets = [0, 24], sizes = [8, 8], strides = [1, 1]} : vector<8x32xf32> to vector<8x8xf32>
    %208 = vector.extract_strided_slice %67 {offsets = [0, 24], sizes = [8, 8], strides = [1, 1]} : vector<8x32xf32> to vector<8x8xf32>
    %209 = vector.extract_strided_slice %68 {offsets = [0, 24], sizes = [8, 8], strides = [1, 1]} : vector<8x32xf32> to vector<8x8xf32>
    %cst_75 = arith.constant dense<0.000000e+00> : vector<8x8xf32>
    %210 = tpu.matmul %207, %208, %cst_75 {dimension_numbers = #tpu.dot_dimension_numbers<[1], [1], [0], [0], [0, 0, 1, 0], [], []>} : vector<8x8xf32>, vector<8x8xf32>, vector<8x8xf32> -> vector<8x8xf32>
    %cst_76 = arith.constant 0.353553385 : f32
    %211 = vector.broadcast %cst_76 : f32 to vector<8x8xf32>
    %212 = arith.mulf %210, %211 : vector<8x8xf32>
    %cst_77 = arith.constant dense<0xFF800000> : vector<8xf32>
    %213 = vector.multi_reduction <maximumf>, %212, %cst_77 [1] : vector<8x8xf32> to vector<8xf32>
    %214 = vector.shape_cast %213 : vector<8xf32> to vector<8x1xf32>
    %215 = vector.broadcast %214 : vector<8x1xf32> to vector<8x8xf32>
    %216 = arith.subf %212, %215 : vector<8x8xf32>
    %217 = math.exp %216 : vector<8x8xf32>
    %cst_78 = arith.constant dense<0.000000e+00> : vector<8xf32>
    %218 = vector.multi_reduction <add>, %217, %cst_78 [1] : vector<8x8xf32> to vector<8xf32>
    %219 = vector.shape_cast %218 : vector<8xf32> to vector<8x1xf32>
    %220 = vector.broadcast %219 : vector<8x1xf32> to vector<8x8xf32>
    %221 = arith.divf %217, %220 : vector<8x8xf32>
    %cst_79 = arith.constant dense<0.000000e+00> : vector<8x8xf32>
    %222 = tpu.matmul %221, %209, %cst_79 {dimension_numbers = #tpu.dot_dimension_numbers<[1], [0], [0], [1], [0, 0, 1, 1], [], []>} : vector<8x8xf32>, vector<8x8xf32>, vector<8x8xf32> -> vector<8x8xf32>
    %223 = vector.extract_strided_slice %73 {offsets = [24, 0], sizes = [8, 32], strides = [1, 1]} : vector<32x32xf32> to vector<8x32xf32>
    %cst_80 = arith.constant dense<0.000000e+00> : vector<8x32xf32>
    %224 = tpu.matmul %222, %223, %cst_80 {dimension_numbers = #tpu.dot_dimension_numbers<[1], [0], [0], [1], [0, 0, 1, 1], [], []>} : vector<8x8xf32>, vector<8x32xf32>, vector<8x32xf32> -> vector<8x32xf32>
    %225 = arith.addf %206, %224 : vector<8x32xf32>
    %226 = vector.broadcast %13 : vector<1x32xf32> to vector<8x32xf32>
    %227 = arith.addf %225, %226 : vector<8x32xf32>
    %228 = arith.addf %227, %227 : vector<8x32xf32>
    %229 = arith.addf %150, %150 : vector<8x32xf32>
    %cst_81 = arith.constant dense<0.000000e+00> : vector<8xf32>
    %230 = vector.multi_reduction <add>, %228, %cst_81 [1] : vector<8x32xf32> to vector<8xf32>
    %231 = vector.shape_cast %230 : vector<8xf32> to vector<8x1xf32>
    %232 = arith.mulf %228, %228 : vector<8x32xf32>
    %cst_82 = arith.constant dense<0.000000e+00> : vector<8xf32>
    %233 = vector.multi_reduction <add>, %232, %cst_82 [1] : vector<8x32xf32> to vector<8xf32>
    %234 = vector.shape_cast %233 : vector<8xf32> to vector<8x1xf32>
    %cst_83 = arith.constant 3.125000e-02 : f32
    %235 = vector.broadcast %cst_83 : f32 to vector<8x1xf32>
    %236 = arith.mulf %231, %235 : vector<8x1xf32>
    %cst_84 = arith.constant 3.125000e-02 : f32
    %237 = vector.broadcast %cst_84 : f32 to vector<8x1xf32>
    %238 = arith.mulf %234, %237 : vector<8x1xf32>
    %239 = arith.mulf %236, %236 : vector<8x1xf32>
    %240 = arith.subf %238, %239 : vector<8x1xf32>
    %cst_85 = arith.constant 9.99999974E-6 : f32
    %241 = vector.broadcast %cst_85 : f32 to vector<8x1xf32>
    %242 = arith.addf %240, %241 : vector<8x1xf32>
    %243 = math.rsqrt %242 : vector<8x1xf32>
    %244 = vector.broadcast %236 : vector<8x1xf32> to vector<8x32xf32>
    %245 = arith.subf %228, %244 : vector<8x32xf32>
    %246 = vector.broadcast %243 : vector<8x1xf32> to vector<8x32xf32>
    %247 = arith.mulf %245, %246 : vector<8x32xf32>
    %248 = vector.broadcast %8 : vector<1x32xf32> to vector<8x32xf32>
    %249 = arith.mulf %247, %248 : vector<8x32xf32>
    %250 = vector.broadcast %9 : vector<1x32xf32> to vector<8x32xf32>
    %251 = arith.addf %249, %250 : vector<8x32xf32>
    %c0_86 = arith.constant 0 : index
    %c256 = arith.constant 256 : index
    %252 = vector.load %arg3[%c0_86, %c256] : memref<32x512xf32, #tpu.memory_space<vmem>>, vector<32x128xf32>
    %cst_87 = arith.constant dense<0.000000e+00> : vector<8x128xf32>
    %253 = tpu.matmul %251, %252, %cst_87 {dimension_numbers = #tpu.dot_dimension_numbers<[1], [0], [0], [1], [0, 0, 1, 1], [], []>} : vector<8x32xf32>, vector<32x128xf32>, vector<8x128xf32> -> vector<8x128xf32>
    %254 = vector.broadcast %16 : vector<1x128xf32> to vector<8x128xf32>
    %255 = arith.addf %253, %254 : vector<8x128xf32>
    %cst_88 = arith.constant 5.000000e-01 : f32
    %256 = vector.broadcast %cst_88 : f32 to vector<8x128xf32>
    %257 = arith.mulf %256, %255 : vector<8x128xf32>
    %cst_89 = arith.constant 4.471500e-02 : f32
    %258 = vector.broadcast %cst_89 : f32 to vector<8x128xf32>
    %259 = arith.mulf %258, %255 : vector<8x128xf32>
    %260 = arith.mulf %259, %255 : vector<8x128xf32>
    %261 = arith.mulf %260, %255 : vector<8x128xf32>
    %262 = arith.addf %255, %261 : vector<8x128xf32>
    %cst_90 = arith.constant 0.797884583 : f32
    %263 = vector.broadcast %cst_90 : f32 to vector<8x128xf32>
    %264 = arith.mulf %263, %262 : vector<8x128xf32>
    %265 = math.tanh %264 : vector<8x128xf32>
    %cst_91 = arith.constant 1.000000e+00 : f32
    %266 = vector.broadcast %cst_91 : f32 to vector<8x128xf32>
    %267 = arith.addf %266, %265 : vector<8x128xf32>
    %268 = arith.mulf %257, %267 : vector<8x128xf32>
    %c0_92 = arith.constant 0 : index
    %c0_93 = arith.constant 0 : index
    %269 = vector.load %arg4[%c0_92, %c0_93] : memref<128x64xf32, #tpu.memory_space<vmem>>, vector<128x32xf32>
    %cst_94 = arith.constant dense<0.000000e+00> : vector<8x32xf32>
    %270 = tpu.matmul %268, %269, %cst_94 {dimension_numbers = #tpu.dot_dimension_numbers<[1], [0], [0], [1], [0, 0, 1, 1], [], []>} : vector<8x128xf32>, vector<128x32xf32>, vector<8x32xf32> -> vector<8x32xf32>
    %271 = arith.addf %228, %270 : vector<8x32xf32>
    %272 = vector.broadcast %14 : vector<1x32xf32> to vector<8x32xf32>
    %273 = arith.addf %271, %272 : vector<8x32xf32>
    %cst_95 = arith.constant dense<0.000000e+00> : vector<8xf32>
    %274 = vector.multi_reduction <add>, %229, %cst_95 [1] : vector<8x32xf32> to vector<8xf32>
    %275 = vector.shape_cast %274 : vector<8xf32> to vector<8x1xf32>
    %276 = arith.mulf %229, %229 : vector<8x32xf32>
    %cst_96 = arith.constant dense<0.000000e+00> : vector<8xf32>
    %277 = vector.multi_reduction <add>, %276, %cst_96 [1] : vector<8x32xf32> to vector<8xf32>
    %278 = vector.shape_cast %277 : vector<8xf32> to vector<8x1xf32>
    %cst_97 = arith.constant 3.125000e-02 : f32
    %279 = vector.broadcast %cst_97 : f32 to vector<8x1xf32>
    %280 = arith.mulf %275, %279 : vector<8x1xf32>
    %cst_98 = arith.constant 3.125000e-02 : f32
    %281 = vector.broadcast %cst_98 : f32 to vector<8x1xf32>
    %282 = arith.mulf %278, %281 : vector<8x1xf32>
    %283 = arith.mulf %280, %280 : vector<8x1xf32>
    %284 = arith.subf %282, %283 : vector<8x1xf32>
    %cst_99 = arith.constant 9.99999974E-6 : f32
    %285 = vector.broadcast %cst_99 : f32 to vector<8x1xf32>
    %286 = arith.addf %284, %285 : vector<8x1xf32>
    %287 = math.rsqrt %286 : vector<8x1xf32>
    %288 = vector.broadcast %280 : vector<8x1xf32> to vector<8x32xf32>
    %289 = arith.subf %229, %288 : vector<8x32xf32>
    %290 = vector.broadcast %287 : vector<8x1xf32> to vector<8x32xf32>
    %291 = arith.mulf %289, %290 : vector<8x32xf32>
    %292 = vector.broadcast %10 : vector<1x32xf32> to vector<8x32xf32>
    %293 = arith.mulf %291, %292 : vector<8x32xf32>
    %294 = vector.broadcast %11 : vector<1x32xf32> to vector<8x32xf32>
    %295 = arith.addf %293, %294 : vector<8x32xf32>
    %c0_100 = arith.constant 0 : index
    %c384 = arith.constant 384 : index
    %296 = vector.load %arg3[%c0_100, %c384] : memref<32x512xf32, #tpu.memory_space<vmem>>, vector<32x128xf32>
    %cst_101 = arith.constant dense<0.000000e+00> : vector<8x128xf32>
    %297 = tpu.matmul %295, %296, %cst_101 {dimension_numbers = #tpu.dot_dimension_numbers<[1], [0], [0], [1], [0, 0, 1, 1], [], []>} : vector<8x32xf32>, vector<32x128xf32>, vector<8x128xf32> -> vector<8x128xf32>
    %298 = vector.broadcast %17 : vector<1x128xf32> to vector<8x128xf32>
    %299 = arith.addf %297, %298 : vector<8x128xf32>
    %cst_102 = arith.constant 5.000000e-01 : f32
    %300 = vector.broadcast %cst_102 : f32 to vector<8x128xf32>
    %301 = arith.mulf %300, %299 : vector<8x128xf32>
    %cst_103 = arith.constant 4.471500e-02 : f32
    %302 = vector.broadcast %cst_103 : f32 to vector<8x128xf32>
    %303 = arith.mulf %302, %299 : vector<8x128xf32>
    %304 = arith.mulf %303, %299 : vector<8x128xf32>
    %305 = arith.mulf %304, %299 : vector<8x128xf32>
    %306 = arith.addf %299, %305 : vector<8x128xf32>
    %cst_104 = arith.constant 0.797884583 : f32
    %307 = vector.broadcast %cst_104 : f32 to vector<8x128xf32>
    %308 = arith.mulf %307, %306 : vector<8x128xf32>
    %309 = math.tanh %308 : vector<8x128xf32>
    %cst_105 = arith.constant 1.000000e+00 : f32
    %310 = vector.broadcast %cst_105 : f32 to vector<8x128xf32>
    %311 = arith.addf %310, %309 : vector<8x128xf32>
    %312 = arith.mulf %301, %311 : vector<8x128xf32>
    %c0_106 = arith.constant 0 : index
    %c32 = arith.constant 32 : index
    %313 = vector.load %arg4[%c0_106, %c32] : memref<128x64xf32, #tpu.memory_space<vmem>>, vector<128x32xf32>
    %cst_107 = arith.constant dense<0.000000e+00> : vector<8x32xf32>
    %314 = tpu.matmul %312, %313, %cst_107 {dimension_numbers = #tpu.dot_dimension_numbers<[1], [0], [0], [1], [0, 0, 1, 1], [], []>} : vector<8x128xf32>, vector<128x32xf32>, vector<8x32xf32> -> vector<8x32xf32>
    %315 = arith.addf %229, %314 : vector<8x32xf32>
    %316 = vector.broadcast %15 : vector<1x32xf32> to vector<8x32xf32>
    %317 = arith.addf %315, %316 : vector<8x32xf32>
    %c0_108 = arith.constant 0 : index
    %c0_109 = arith.constant 0 : index
    %c0_110 = arith.constant 0 : index
    %318 = vector.load %arg5[%c0_108, %c0_109, %c0_110] : memref<1x8x64xf32, #tpu.memory_space<vmem>>, vector<1x8x32xf32>
    %319 = vector.shape_cast %318 : vector<1x8x32xf32> to vector<8x32xf32>
    %320 = vector.shape_cast %273 : vector<8x32xf32> to vector<1x8x32xf32>
    tpu.vector_store %arg5[%c0_108, %c0_109, %c0_110], %320 {strides = array<i32>} : memref<1x8x64xf32, #tpu.memory_space<vmem>>, vector<1x8x32xf32>,
    %c0_111 = arith.constant 0 : index
    %c0_112 = arith.constant 0 : index
    %c32_113 = arith.constant 32 : index
    %321 = vector.load %arg5[%c0_111, %c0_112, %c32_113] : memref<1x8x64xf32, #tpu.memory_space<vmem>>, vector<1x8x32xf32>
    %322 = vector.shape_cast %321 : vector<1x8x32xf32> to vector<8x32xf32>
    %323 = vector.shape_cast %317 : vector<8x32xf32> to vector<1x8x32xf32>
    tpu.vector_store %arg5[%c0_111, %c0_112, %c32_113], %323 {strides = array<i32>} : memref<1x8x64xf32, #tpu.memory_space<vmem>>, vector<1x8x32xf32>,
    return
  }
  func.func @transform_0(%arg0: i32) -> (i32, i32, i32) {
    %c0_i32 = arith.constant 0 : i32
    %c0_i32_0 = arith.constant 0 : i32
    %c0_i32_1 = arith.constant 0 : i32
    return %arg0, %c0_i32, %c0_i32_0 : i32, i32, i32
  }
  func.func @transform_1(%arg0: i32) -> (i32, i32) {
    %c0_i32 = arith.constant 0 : i32
    %c0_i32_0 = arith.constant 0 : i32
    %c0_i32_1 = arith.constant 0 : i32
    return %c0_i32, %c0_i32_0 : i32, i32
  }
  func.func @transform_2(%arg0: i32) -> (i32, i32) {
    %c0_i32 = arith.constant 0 : i32
    %c0_i32_0 = arith.constant 0 : i32
    %c0_i32_1 = arith.constant 0 : i32
    return %c0_i32, %c0_i32_0 : i32, i32
  }
  func.func @transform_3(%arg0: i32) -> (i32, i32) {
    %c0_i32 = arith.constant 0 : i32
    %c0_i32_0 = arith.constant 0 : i32
    %c0_i32_1 = arith.constant 0 : i32
    return %c0_i32, %c0_i32_0 : i32, i32
  }
  func.func @transform_4(%arg0: i32) -> (i32, i32, i32) {
    %c0_i32 = arith.constant 0 : i32
    %c0_i32_0 = arith.constant 0 : i32
    %c0_i32_1 = arith.constant 0 : i32
    return %arg0, %c0_i32, %c0_i32_0 : i32, i32, i32
  }
}

</mosaic_0001>

<llo_original>
// kernel: tpu_custom_call.1
$region0: #{tpu_custom_call.1}
  #allocation0 [shape = 'u32[]', space=smem, size = 0x4, offset = 0x4, fixed_abs, tag = 'smem constant byte address 0x4 - core index']
  #allocation1 [shape = 'u32[72,128]{1,0:T(1,128)}', space=vmem, size = 0x9000, scoped, tag = 'internal scratch']
  %s0 = inlined_call_operand.vmem [shape: f32[2,8,64], index: 0, kind: input, shape index: {}]
  %s1 = inlined_call_operand.vmem [shape: f32[16,128], index: 1, kind: input, shape index: {}]
  %s2 = inlined_call_operand.vmem [shape: f32[32,512], index: 2, kind: input, shape index: {}]
  %s3 = inlined_call_operand.vmem [shape: f32[128,64], index: 3, kind: input, shape index: {}]
  %s4 = inlined_call_operand.hbm [shape: f32[2,8,64], index: 4, kind: output, shape index: {}]
  %s5 = sld [smem:[#allocation0]]
  $region49: #{tpu_custom_call.1} parent=0
    _
  %s7 = ssub.s32 1, %s5
  %s8 = scalar_select 0, %s7, %s5
  $region1: #{tpu_custom_call.1} parent=0
    #allocation2 [shape = 'u8[8192]{0}', space=vmem, size = 0x2000, scoped, tag = 'output window, operand 0']
    #allocation3 [shape = 's32[2]{0}', space=sflag, size = 0x8, scoped, tag = 'scoped memory for tpu_custom_call.1']
    %9 = vsyncpa [#allocation3], 0
    %s10 = scalar_lea.sflag [#allocation3], 1
    %11 = vsyncpa %s10, 0
    loop: start=0, step=1, limit=4
    $region2: #{tpu_custom_call.1} parent=1 // loop_pre_header
      _
    $region3: #{tpu_custom_call.1} parent=1 // loop_header
      %s13 = sphi 0, %s17
      %p14 = scmp.ge.s32.totalorder %s13, 4
      %s23 = sphi 0, %s25
      %s26 = sphi 0, %s23
      %s27 = sphi 0, %s26
      %s43 = sphi 0, %s27
      %s47 = sphi 0, %s47
      %s49 = sphi 0, %s47
      %s50 = sphi 0, %s49
      %s64 = sphi 0, %s50
      %s68 = sphi 0, %s68
      %s70 = sphi 0, %s68
      %s71 = sphi 0, %s70
      %s85 = sphi 0, %s71
      %s89 = sphi 0, %s89
      %s91 = sphi 0, %s89
      %s92 = sphi 0, %s91
      %s106 = sphi 0, %s92
      %s112 = sphi 0, %s114
      %s115 = sphi 0, %s112
      %s116 = sphi 0, %s115
      %s132 = sphi 0, %s116
    $region4: #{tpu_custom_call.1} parent=1 // loop_header_branch
      %16 = sbr.rel (%p14) target = $region8
    $region5: #{tpu_custom_call.1} parent=1 // loop_body
      %s18 = ssub.s32 %s13, 1
      %s19 = ssub.s32 %s13, 2
      %s20 = sadd.s32 %s13, 1
      %s21 = ssub.s32 %s13, %s20
      %p22 = scmp.eq.s32.totalorder %s21, 0
      %s24 = sadd.s32 %s23, 1
      %s25 = scalar_select %p22, %s23, %s24
      %p28 = pneg %p22
      %p29 = scmp.eq.s32.totalorder %s13, 1
      %p30 = por %p28, %p29
      %p31 = scmp.ne.s32.totalorder %s23, %s26
      %p32 = scmp.eq.s32.totalorder %s13, 0
      %p33 = por %p31, %p32
      %p34 = scmp.ne.s32.totalorder %s23, %s26
      %p35 = scmp.eq.s32.totalorder %s18, 1
      %p36 = por %p34, %p35
      %p37 = scmp.ne.s32.totalorder %s26, %s27
      %p38 = scmp.eq.s32.totalorder %s18, 0
      %p39 = por %p37, %p38
      %p40 = scmp.ne.s32.totalorder %s26, %s27
      %p41 = scmp.eq.s32.totalorder %s19, 1
      %p42 = por %p40, %p41
      %p44 = scmp.ne.s32.totalorder %s27, %s43
      %p45 = scmp.eq.s32.totalorder %s19, 0
      %p46 = por %p44, %p45
      %s48 = sadd.s32 %s47, 1
      %p51 = scmp.eq.s32.totalorder %s13, 1
      %p52 = scmp.ne.s32.totalorder %s47, %s49
      %p53 = scmp.eq.s32.totalorder %s13, 0
      %p54 = por %p52, %p53
      %p55 = scmp.ne.s32.totalorder %s47, %s49
      %p56 = scmp.eq.s32.totalorder %s18, 1
      %p57 = por %p55, %p56
      %p58 = scmp.ne.s32.totalorder %s49, %s50
      %p59 = scmp.eq.s32.totalorder %s18, 0
      %p60 = por %p58, %p59
      %p61 = scmp.ne.s32.totalorder %s49, %s50
      %p62 = scmp.eq.s32.totalorder %s19, 1
      %p63 = por %p61, %p62
      %p65 = scmp.ne.s32.totalorder %s50, %s64
      %p66 = scmp.eq.s32.totalorder %s19, 0
      %p67 = por %p65, %p66
      %s69 = sadd.s32 %s68, 1
      %p72 = scmp.eq.s32.totalorder %s13, 1
      %p73 = scmp.ne.s32.totalorder %s68, %s70
      %p74 = scmp.eq.s32.totalorder %s13, 0
      %p75 = por %p73, %p74
      %p76 = scmp.ne.s32.totalorder %s68, %s70
      %p77 = scmp.eq.s32.totalorder %s18, 1
      %p78 = por %p76, %p77
      %p79 = scmp.ne.s32.totalorder %s70, %s71
      %p80 = scmp.eq.s32.totalorder %s18, 0
      %p81 = por %p79, %p80
      %p82 = scmp.ne.s32.totalorder %s70, %s71
      %p83 = scmp.eq.s32.totalorder %s19, 1
      %p84 = por %p82, %p83
      %p86 = scmp.ne.s32.totalorder %s71, %s85
      %p87 = scmp.eq.s32.totalorder %s19, 0
      %p88 = por %p86, %p87
      %s90 = sadd.s32 %s89, 1
      %p93 = scmp.eq.s32.totalorder %s13, 1
      %p94 = scmp.ne.s32.totalorder %s89, %s91
      %p95 = scmp.eq.s32.totalorder %s13, 0
      %p96 = por %p94, %p95
      %p97 = scmp.ne.s32.totalorder %s89, %s91
      %p98 = scmp.eq.s32.totalorder %s18, 1
      %p99 = por %p97, %p98
      %p100 = scmp.ne.s32.totalorder %s91, %s92
      %p101 = scmp.eq.s32.totalorder %s18, 0
      %p102 = por %p100, %p101
      %p103 = scmp.ne.s32.totalorder %s91, %s92
      %p104 = scmp.eq.s32.totalorder %s19, 1
      %p105 = por %p103, %p104
      %p107 = scmp.ne.s32.totalorder %s92, %s106
      %p108 = scmp.eq.s32.totalorder %s19, 0
      %p109 = por %p107, %p108
      %s110 = ssub.s32 %s13, %s20
      %p111 = scmp.eq.s32.totalorder %s110, 0
      %s113 = sadd.s32 %s112, 1
      %s114 = scalar_select %p111, %s112, %s113
      %p117 = pneg %p111
      %p118 = scmp.eq.s32.totalorder %s13, 1
      %p119 = por %p117, %p118
      %p120 = scmp.ne.s32.totalorder %s112, %s115
      %p121 = scmp.eq.s32.totalorder %s13, 0
      %p122 = por %p120, %p121
      %p123 = scmp.ne.s32.totalorder %s112, %s115
      %p124 = scmp.eq.s32.totalorder %s18, 1
      %p125 = por %p123, %p124
      %p126 = scmp.ne.s32.totalorder %s115, %s116
      %p127 = scmp.eq.s32.totalorder %s18, 0
      %p128 = por %p126, %p127
      %p129 = scmp.ne.s32.totalorder %s115, %s116
      %p130 = scmp.eq.s32.totalorder %s19, 1
      %p131 = por %p129, %p130
      %p133 = scmp.ne.s32.totalorder %s116, %s132
      %p134 = scmp.eq.s32.totalorder %s19, 0
      %p135 = por %p133, %p134
      %p136 = scmp.le.s32.totalorder 1, %s13
      %p137 = scmp.lt.s32.totalorder %s13, 3
      %p138 = pnand %p136, %p137
      %p139 = pneg %p138
      // Predicated region
      $region9: #{tpu_custom_call.1} parent=5 // pred_check
        _
      $region10: #{tpu_custom_call.1} parent=5 // pred_check_branch
        %141 = sbr.rel (%p138) target = $region12
      $region11: #{tpu_custom_call.1} parent=5 // pred_region
        %s142 = ssub.s32 %s13, 1
        // Predicated region
        $region13: #{tpu_custom_call.1} parent=11 // pred_check
          %p143 = pneg %p60
        $region14: #{tpu_custom_call.1} parent=11 // pred_check_branch
          %145 = sbr.rel (%p143) target = $region16
        $region15: #{tpu_custom_call.1} parent=11 // pred_region
          _
        $region16: #{tpu_custom_call.1} parent=11 // pred_fallthru
          _
        // Predicated region
        $region17: #{tpu_custom_call.1} parent=11 // pred_check
          %p146 = pneg %p81
        $region18: #{tpu_custom_call.1} parent=11 // pred_check_branch
          %148 = sbr.rel (%p146) target = $region20
        $region19: #{tpu_custom_call.1} parent=11 // pred_region
          _
        $region20: #{tpu_custom_call.1} parent=11 // pred_fallthru
          _
        // Predicated region
        $region21: #{tpu_custom_call.1} parent=11 // pred_check
          %p149 = pneg %p102
        $region22: #{tpu_custom_call.1} parent=11 // pred_check_branch
          %151 = sbr.rel (%p149) target = $region24
        $region23: #{tpu_custom_call.1} parent=11 // pred_region
          _
        $region24: #{tpu_custom_call.1} parent=11 // pred_fallthru
          _
      $region12: #{tpu_custom_call.1} parent=5 // pred_fallthru
        _
      %p152 = scmp.lt.s32.totalorder %s13, 2
      // Predicated region
      $region25: #{tpu_custom_call.1} parent=5 // pred_check
        %p153 = pneg %p152
      $region26: #{tpu_custom_call.1} parent=5 // pred_check_branch
        %155 = sbr.rel (%p153) target = $region28
      $region27: #{tpu_custom_call.1} parent=5 // pred_region
        // Predicated region
        $region29: #{tpu_custom_call.1} parent=27 // pred_check
          %p156 = pneg %p33
        $region30: #{tpu_custom_call.1} parent=27 // pred_check_branch
          %158 = sbr.rel (%p156) target = $region32
        $region31: #{tpu_custom_call.1} parent=27 // pred_region
          %p159 = scmp.lt.s32.totalorder %s13, 1
          %s160 = scalar_select %p159, %s13, 1
          %s161 = smul.addr %s160, 8
          %s162 = scalar_lea.vmem %s0, %s161
        $region32: #{tpu_custom_call.1} parent=27 // pred_fallthru
          _
      $region28: #{tpu_custom_call.1} parent=5 // pred_fallthru
        _
      %p163 = scmp.le.s32.totalorder 1, %s13
      %p164 = scmp.lt.s32.totalorder %s13, 3
      %p165 = pnand %p163, %p164
      %p166 = pneg %p165
      // Predicated region
      $region33: #{tpu_custom_call.1} parent=5 // pred_check
        _
      $region34: #{tpu_custom_call.1} parent=5 // pred_check_branch
        %168 = sbr.rel (%p165) target = $region36
      $region35: #{tpu_custom_call.1} parent=5 // pred_region
        %s169 = ssub.s32 %s13, 1
        %p170 = scmp.lt.s32.totalorder %s18, 1
        %s171 = scalar_select %p170, %s18, 1
        %s172 = smul.addr %s171, 8
        %s173 = scalar_lea.vmem %s0, %s172
        %p174 = pneg %p39
        %p175 = pneg %p36
        %p176 = pneg %p60
        %p177 = pneg %p57
        %p178 = pneg %p81
        %p179 = pneg %p78
        %p180 = pneg %p102
        %p181 = pneg %p99
        %p182 = pneg %p128
        %p183 = pneg %p125
        %s184 = sand.u32 %s115, 1
        %s185 = scalar_lea.sflag [#allocation3], %s184
        %s186 = sand.u32 %s115, 1
        %s187 = smul.addr %s186, 8
        %s188 = scalar_lea.vmem [#allocation2], %s187
        %p189 = scmp.lt.s32.totalorder %s18, 1
        %s190 = scalar_select %p189, %s18, 1
        %s191 = smul.addr %s190, 8
        %s192 = scalar_lea.vmem %s0, %s191
        %v193 = vld [vmem:[%s192] sm:$0xff]
        %v194 = vld [vmem:[%s1] sm:$0x1]
        %v195 = vld [vmem:[%s1 + $0x1] sm:$0x1]
        %v196 = vld [vmem:[%s1 + $0x2] sm:$0x1]
        %v197 = vld [vmem:[%s1 + $0x3] sm:$0x1]
        %v198 = vld [vmem:[%s1 + $0x4] sm:$0x1]
        %v199 = vld [vmem:[%s1 + $0x5] sm:$0x1]
        %v200 = vld [vmem:[%s1 + $0x6] sm:$0x1]
        %v201 = vld [vmem:[%s1 + $0x7] sm:$0x1]
        %v202 = vld [vmem:[%s1 + $0x8] sm:$0x1]
        %v203 = vld [vmem:[%s1 + $0x9] sm:$0x1]
        %v204 = vld [vmem:[%s1 + $0xa] sm:$0x1]
        %v205 = vld [vmem:[%s1 + $0xb] sm:$0x1]
        %v206 = vld [vmem:[%s1 + $0xc] sm:$0x1]
        %v207 = vld [vmem:[%s1 + $0xd] sm:$0x1]
        %vm208 = vcmask 261120
        %v209 = vsel %vm208, %v193, 0.0
        %210 = vadd.xlane.f32.xlu0 %v209
        %v211 = vpop.xlane.xlu0 %210
        %v212 = vmul.f32 %v193, %v193
        %v213 = vsel %vm208, %v212, 0.0
        %214 = vadd.xlane.f32.xlu0 %v213
        %v215 = vpop.xlane.xlu0 %214
        %v216 = vmul.f32 %v211, 0.03125
        %v217 = vmul.f32 %v215, 0.03125
        %v218 = vmul.f32 %v216, %v216
        %v219 = vsub.f32 %v217, %v218
        %v220 = vadd.f32 %v219, 1e-05
        %v221 = vrsqrt.pop %v220
        %v222 = vmul.f32 %v221, %v220
        %v223 = vmul.f32 %v222, %v221
        %v224 = vmul.f32 0.5, %v223
        %v225 = vsub.f32 1.5, %v224
        %v226 = vmul.f32 %v221, %v225
        %vm227 = vweird.f32 %v220
        %vm228 = vweird.f32 %v221
        %vm229 = vmor %vm227, %vm228
        %v230 = vsel %vm229, %v221, %v226
        %v231 = vsub.f32 %v193, %v216
        %v232 = vmul.f32 %v231, %v230
        %v233 = vperm.slane %v194, 0
        %v234 = vmul.f32 %v232, %v233
        %v235 = vperm.slane %v195, 0
        %v236 = vadd.f32 %v234, %v235
        %238 = vrot.lane.b32.xlu0 %v193, 96
        %v239 = vpop.permute.xlu0 %238
        %v241 = vsel %vm208, %v239, 0.0
        %242 = vadd.xlane.f32.xlu0 %v241
        %v243 = vpop.xlane.xlu0 %242
        %245 = vrot.lane.b32.xlu0 %v212, 96
        %v246 = vpop.permute.xlu0 %245
        %v248 = vsel %vm208, %v246, 0.0
        %249 = vadd.xlane.f32.xlu0 %v248
        %v250 = vpop.xlane.xlu0 %249
        %v251 = vmul.f32 %v243, 0.03125
        %v252 = vmul.f32 %v250, 0.03125
        %v253 = vmul.f32 %v251, %v251
        %v254 = vsub.f32 %v252, %v253
        %v255 = vadd.f32 %v254, 1e-05
        %v256 = vrsqrt.pop %v255
        %v257 = vmul.f32 %v256, %v255
        %v258 = vmul.f32 %v257, %v256
        %v259 = vmul.f32 0.5, %v258
        %v260 = vsub.f32 1.5, %v259
        %v261 = vmul.f32 %v256, %v260
        %vm262 = vweird.f32 %v255
        %vm263 = vweird.f32 %v256
        %vm264 = vmor %vm262, %vm263
        %v265 = vsel %vm264, %v256, %v261
        %v266 = vsub.f32 %v193, %v251
        %v267 = vmul.f32 %v266, %v265
        %v268 = vperm.slane %v196, 0
        %270 = vrot.lane.b32.xlu0 %v268, 32
        %v271 = vpop.permute.xlu0 %270
        %v273 = vmul.f32 %v267, %v271
        %v274 = vperm.slane %v197, 0
        %276 = vrot.lane.b32.xlu0 %v274, 32
        %v277 = vpop.permute.xlu0 %276
        %v279 = vadd.f32 %v273, %v277
        %v280 = vld [vmem:[%s2] sm:$0xff]
        %v281 = vld [vmem:[%s2 + $0x20] sm:$0xff]
        %v282 = vld [vmem:[%s2 + $0x40] sm:$0xff]
        %v283 = vld [vmem:[%s2 + $0x60] sm:$0xff]
        %v285 = vsel %vm208, %v236, 0
        %287 = vmatpush.msra.mxu0 0.0
        %288 = vmatpush.msra.mxu0 0.0
        %289 = vmatpush.msra.mxu0 0.0
        %290 = vmatpush.msra.mxu0 0.0
        %291 = vmatpush.msra.mxu0 0.0
        %292 = vmatpush.msra.mxu0 0.0
        %293 = vmatpush.msra.mxu0 0.0
        %294 = vmatpush.msra.mxu0 0.0
        %295 = vmatpush.msra.mxu0 0.0
        %296 = vmatpush.msra.mxu0 0.0
        %297 = vmatpush.msra.mxu0 0.0
        %298 = vmatpush.msra.mxu0 0.0
        %299 = vmatpush.msra.mxu0 %v283
        %300 = vmatpush.msra.mxu0 %v282
        %301 = vmatpush.msra.mxu0 %v281
        %302 = vmatpush.msra.mxu0 %v280
        %303 = vmatmul.f32.gmra.mxu0 %v285
        %v304 = vpop.f32.mrf.mxu0
        %v305 = vadd.f32 0.0, %v304
        %306 = vdwg.mxu0
        %v307 = vld [vmem:[%s2] sm:$0xff]
        %v308 = vld [vmem:[%s2 + $0x8] sm:$0xff]
        %v309 = vld [vmem:[%s2 + $0x20] sm:$0xff]
        %v310 = vld [vmem:[%s2 + $0x28] sm:$0xff]
        %v311 = vld [vmem:[%s2 + $0x40] sm:$0xff]
        %v312 = vld [vmem:[%s2 + $0x48] sm:$0xff]
        %v313 = vld [vmem:[%s2 + $0x60] sm:$0xff]
        %v314 = vld [vmem:[%s2 + $0x68] sm:$0xff]
        %316 = vrot.lane.b32.xlu0 %v279, 96
        %v317 = vpop.permute.xlu0 %316
        %326 = vrot.lane.b32.xlu0 %v307, 32
        %v327 = vpop.permute.xlu0 %326
        %328 = vrot.lane.b32.xlu0 %v308, 32
        %v329 = vpop.permute.xlu0 %328
        %330 = vrot.lane.b32.xlu0 %v309, 32
        %v331 = vpop.permute.xlu0 %330
        %332 = vrot.lane.b32.xlu0 %v310, 32
        %v333 = vpop.permute.xlu0 %332
        %334 = vrot.lane.b32.xlu0 %v311, 32
        %v335 = vpop.permute.xlu0 %334
        %336 = vrot.lane.b32.xlu0 %v312, 32
        %v337 = vpop.permute.xlu0 %336
        %338 = vrot.lane.b32.xlu0 %v313, 32
        %v339 = vpop.permute.xlu0 %338
        %340 = vrot.lane.b32.xlu0 %v314, 32
        %v341 = vpop.permute.xlu0 %340
        %v342 = vsel %vm208, %v327, %v329
        %v343 = vsel %vm208, %v331, %v333
        %v344 = vsel %vm208, %v335, %v337
        %v345 = vsel %vm208, %v339, %v341
        %v350 = vsel %vm208, %v317, 0
        %352 = vmatpush.msra.mxu0 0.0
        %353 = vmatpush.msra.mxu0 0.0
        %354 = vmatpush.msra.mxu0 0.0
        %355 = vmatpush.msra.mxu0 0.0
        %356 = vmatpush.msra.mxu0 0.0
        %357 = vmatpush.msra.mxu0 0.0
        %358 = vmatpush.msra.mxu0 0.0
        %359 = vmatpush.msra.mxu0 0.0
        %360 = vmatpush.msra.mxu0 0.0
        %361 = vmatpush.msra.mxu0 0.0
        %362 = vmatpush.msra.mxu0 0.0
        %363 = vmatpush.msra.mxu0 0.0
        %364 = vmatpush.msra.mxu0 %v345
        %365 = vmatpush.msra.mxu0 %v344
        %366 = vmatpush.msra.mxu0 %v343
        %367 = vmatpush.msra.mxu0 %v342
        %368 = vmatmul.f32.gmra.mxu0 %v350
        %v369 = vpop.f32.mrf.mxu0
        %v370 = vadd.f32 0.0, %v369
        %371 = vdwg.mxu0
        %373 = vrot.lane.b32.xlu0 %v370, 96
        %v374 = vpop.permute.xlu0 %373
        %vm375 = vcmask 64512
        %v377 = vsel %vm375, %v305, 0
        %v379 = vsel %vm375, %v374, 0
        %381 = vmatpush.xpose.msra.mxu0 0.0
        %382 = vmatpush.xpose.msra.mxu0 0.0
        %383 = vmatpush.xpose.msra.mxu0 0.0
        %384 = vmatpush.xpose.msra.mxu0 0.0
        %385 = vmatpush.xpose.msra.mxu0 0.0
        %386 = vmatpush.xpose.msra.mxu0 0.0
        %387 = vmatpush.xpose.msra.mxu0 0.0
        %388 = vmatpush.xpose.msra.mxu0 0.0
        %389 = vmatpush.xpose.msra.mxu0 0.0
        %390 = vmatpush.xpose.msra.mxu0 0.0
        %391 = vmatpush.xpose.msra.mxu0 0.0
        %392 = vmatpush.xpose.msra.mxu0 0.0
        %393 = vmatpush.xpose.msra.mxu0 0.0
        %394 = vmatpush.xpose.msra.mxu0 0.0
        %395 = vmatpush.xpose.msra.mxu0 0.0
        %396 = vmatpush.xpose.msra.mxu0 %v379
        %397 = vmatmul.f32.gmra.mxu0 %v377
        %v398 = vpop.f32.mrf.mxu0
        %v399 = vadd.f32 0.0, %v398
        %400 = vdwg.mxu0
        %v401 = vmul.f32 %v399, 0.35355338
        %v402 = vsel %vm375, %v401, -inf
        %403 = vmax.xlane.f32.xlu0 %v402
        %v404 = vpop.xlane.xlu0 %403
        %v405 = vsub.f32 %v401, %v404
        %v406 = vmul.f32 %v405, 1.442695
        %v407 = vpow.pop %v406
        %v408 = vsel %vm375, %v407, 0.0
        %409 = vadd.xlane.f32.xlu0 %v408
        %v410 = vpop.xlane.xlu0 %409
        %v411 = vrcp.pop %v410
        %v412 = vmul.f32 %v410, %v411
        %v413 = vsub.f32 1.0, %v412
        %v414 = vmul.f32 %v411, %v413
        %v415 = vadd.f32 %v411, %v414
        %vm416 = vweird.f32 %v410
        %vm417 = vweird.f32 %v411
        %vm418 = vmor %vm416, %vm417
        %v419 = vsel %vm418, %v411, %v415
        %v420 = vand.u32 2147483647, %v410
        %vm421 = vcmp.eq.f32.partialorder %v420, 8.507059e+37
        %v422 = vand.u32 %v410, 2147483648
        %v423 = vor.u32 1.1754944e-38, %v422
        %v424 = vsel %vm421, %v423, %v419
        %v425 = vmul.f32 %v407, %v424
        %426 = vrot.lane.b32.xlu0 %v370, 64
        %v427 = vpop.permute.xlu0 %426
        %v430 = vsel %vm375, %v425, 0
        %432 = vmatpush.msra.mxu0 0.0
        %433 = vmatpush.msra.mxu0 0.0
        %434 = vmatpush.msra.mxu0 0.0
        %435 = vmatpush.msra.mxu0 0.0
        %436 = vmatpush.msra.mxu0 0.0
        %437 = vmatpush.msra.mxu0 0.0
        %438 = vmatpush.msra.mxu0 0.0
        %439 = vmatpush.msra.mxu0 0.0
        %440 = vmatpush.msra.mxu0 0.0
        %441 = vmatpush.msra.mxu0 0.0
        %442 = vmatpush.msra.mxu0 0.0
        %443 = vmatpush.msra.mxu0 0.0
        %444 = vmatpush.msra.mxu0 0.0
        %445 = vmatpush.msra.mxu0 0.0
        %446 = vmatpush.msra.mxu0 0.0
        %447 = vmatpush.msra.mxu0 %v427
        %448 = vmatmul.f32.gmra.mxu0 %v430
        %v449 = vpop.f32.mrf.mxu0
        %v450 = vadd.f32 0.0, %v449
        %451 = vdwg.mxu0
        %452 = vrot.lane.b32.xlu0 %v305, 120
        %v453 = vpop.permute.xlu0 %452
        %454 = vrot.lane.b32.xlu0 %v370, 88
        %v455 = vpop.permute.xlu0 %454
        %v456 = vsel %vm375, %v453, 0
        %v458 = vsel %vm375, %v455, 0
        %460 = vmatpush.xpose.msra.mxu0 0.0
        %461 = vmatpush.xpose.msra.mxu0 0.0
        %462 = vmatpush.xpose.msra.mxu0 0.0
        %463 = vmatpush.xpose.msra.mxu0 0.0
        %464 = vmatpush.xpose.msra.mxu0 0.0
        %465 = vmatpush.xpose.msra.mxu0 0.0
        %466 = vmatpush.xpose.msra.mxu0 0.0
        %467 = vmatpush.xpose.msra.mxu0 0.0
        %468 = vmatpush.xpose.msra.mxu0 0.0
        %469 = vmatpush.xpose.msra.mxu0 0.0
        %470 = vmatpush.xpose.msra.mxu0 0.0
        %471 = vmatpush.xpose.msra.mxu0 0.0
        %472 = vmatpush.xpose.msra.mxu0 0.0
        %473 = vmatpush.xpose.msra.mxu0 0.0
        %474 = vmatpush.xpose.msra.mxu0 0.0
        %475 = vmatpush.xpose.msra.mxu0 %v458
        %476 = vmatmul.f32.gmra.mxu0 %v456
        %v477 = vpop.f32.mrf.mxu0
        %v478 = vadd.f32 0.0, %v477
        %479 = vdwg.mxu0
        %v480 = vmul.f32 %v478, 0.35355338
        %v481 = vsel %vm375, %v480, -inf
        %482 = vmax.xlane.f32.xlu0 %v481
        %v483 = vpop.xlane.xlu0 %482
        %v484 = vsub.f32 %v480, %v483
        %v485 = vmul.f32 %v484, 1.442695
        %v486 = vpow.pop %v485
        %v487 = vsel %vm375, %v486, 0.0
        %488 = vadd.xlane.f32.xlu0 %v487
        %v489 = vpop.xlane.xlu0 %488
        %v490 = vrcp.pop %v489
        %v491 = vmul.f32 %v489, %v490
        %v492 = vsub.f32 1.0, %v491
        %v493 = vmul.f32 %v490, %v492
        %v494 = vadd.f32 %v490, %v493
        %vm495 = vweird.f32 %v489
        %vm496 = vweird.f32 %v490
        %vm497 = vmor %vm495, %vm496
        %v498 = vsel %vm497, %v490, %v494
        %v499 = vand.u32 2147483647, %v489
        %vm500 = vcmp.eq.f32.partialorder %v499, 8.507059e+37
        %v501 = vand.u32 %v489, 2147483648
        %v502 = vor.u32 1.1754944e-38, %v501
        %v503 = vsel %vm500, %v502, %v498
        %v504 = vmul.f32 %v486, %v503
        %505 = vrot.lane.b32.xlu0 %v370, 56
        %v506 = vpop.permute.xlu0 %505
        %v509 = vsel %vm375, %v504, 0
        %511 = vmatpush.msra.mxu0 0.0
        %512 = vmatpush.msra.mxu0 0.0
        %513 = vmatpush.msra.mxu0 0.0
        %514 = vmatpush.msra.mxu0 0.0
        %515 = vmatpush.msra.mxu0 0.0
        %516 = vmatpush.msra.mxu0 0.0
        %517 = vmatpush.msra.mxu0 0.0
        %518 = vmatpush.msra.mxu0 0.0
        %519 = vmatpush.msra.mxu0 0.0
        %520 = vmatpush.msra.mxu0 0.0
        %521 = vmatpush.msra.mxu0 0.0
        %522 = vmatpush.msra.mxu0 0.0
        %523 = vmatpush.msra.mxu0 0.0
        %524 = vmatpush.msra.mxu0 0.0
        %525 = vmatpush.msra.mxu0 0.0
        %526 = vmatpush.msra.mxu0 %v506
        %527 = vmatmul.f32.gmra.mxu0 %v509
        %v528 = vpop.f32.mrf.mxu0
        %v529 = vadd.f32 0.0, %v528
        %530 = vdwg.mxu0
        %531 = vrot.lane.b32.xlu0 %v310, 64
        %v532 = vpop.permute.xlu0 %531
        %v535 = vsel %vm375, %v529, 0
        %537 = vmatpush.msra.mxu0 0.0
        %538 = vmatpush.msra.mxu0 0.0
        %539 = vmatpush.msra.mxu0 0.0
        %540 = vmatpush.msra.mxu0 0.0
        %541 = vmatpush.msra.mxu0 0.0
        %542 = vmatpush.msra.mxu0 0.0
        %543 = vmatpush.msra.mxu0 0.0
        %544 = vmatpush.msra.mxu0 0.0
        %545 = vmatpush.msra.mxu0 0.0
        %546 = vmatpush.msra.mxu0 0.0
        %547 = vmatpush.msra.mxu0 0.0
        %548 = vmatpush.msra.mxu0 0.0
        %549 = vmatpush.msra.mxu0 0.0
        %550 = vmatpush.msra.mxu0 0.0
        %551 = vmatpush.msra.mxu0 0.0
        %552 = vmatpush.msra.mxu0 %v532
        %553 = vmatmul.f32.gmra.mxu0 %v535
        %v554 = vpop.f32.mrf.mxu0
        %v555 = vadd.f32 0.0, %v554
        %556 = vdwg.mxu0
        %557 = vrot.lane.b32.xlu0 %v308, 64
        %v558 = vpop.permute.xlu0 %557
        %v561 = vsel %vm375, %v450, 0
        %563 = vmatpush.msra.mxu0 0.0
        %564 = vmatpush.msra.mxu0 0.0
        %565 = vmatpush.msra.mxu0 0.0
        %566 = vmatpush.msra.mxu0 0.0
        %567 = vmatpush.msra.mxu0 0.0
        %568 = vmatpush.msra.mxu0 0.0
        %569 = vmatpush.msra.mxu0 0.0
        %570 = vmatpush.msra.mxu0 0.0
        %571 = vmatpush.msra.mxu0 0.0
        %572 = vmatpush.msra.mxu0 0.0
        %573 = vmatpush.msra.mxu0 0.0
        %574 = vmatpush.msra.mxu0 0.0
        %575 = vmatpush.msra.mxu0 0.0
        %576 = vmatpush.msra.mxu0 0.0
        %577 = vmatpush.msra.mxu0 0.0
        %578 = vmatpush.msra.mxu0 %v558
        %579 = vmatmul.f32.gmra.mxu0 %v561
        %v580 = vpop.f32.mrf.mxu0
        %v581 = vadd.f32 %v555, %v580
        %582 = vdwg.mxu0
        %583 = vrot.lane.b32.xlu0 %v305, 112
        %v584 = vpop.permute.xlu0 %583
        %585 = vrot.lane.b32.xlu0 %v370, 80
        %v586 = vpop.permute.xlu0 %585
        %v587 = vsel %vm375, %v584, 0
        %v589 = vsel %vm375, %v586, 0
        %591 = vmatpush.xpose.msra.mxu0 0.0
        %592 = vmatpush.xpose.msra.mxu0 0.0
        %593 = vmatpush.xpose.msra.mxu0 0.0
        %594 = vmatpush.xpose.msra.mxu0 0.0
        %595 = vmatpush.xpose.msra.mxu0 0.0
        %596 = vmatpush.xpose.msra.mxu0 0.0
        %597 = vmatpush.xpose.msra.mxu0 0.0
        %598 = vmatpush.xpose.msra.mxu0 0.0
        %599 = vmatpush.xpose.msra.mxu0 0.0
        %600 = vmatpush.xpose.msra.mxu0 0.0
        %601 = vmatpush.xpose.msra.mxu0 0.0
        %602 = vmatpush.xpose.msra.mxu0 0.0
        %603 = vmatpush.xpose.msra.mxu0 0.0
        %604 = vmatpush.xpose.msra.mxu0 0.0
        %605 = vmatpush.xpose.msra.mxu0 0.0
        %606 = vmatpush.xpose.msra.mxu0 %v589
        %607 = vmatmul.f32.gmra.mxu0 %v587
        %v608 = vpop.f32.mrf.mxu0
        %v609 = vadd.f32 0.0, %v608
        %610 = vdwg.mxu0
        %v611 = vmul.f32 %v609, 0.35355338
        %v612 = vsel %vm375, %v611, -inf
        %613 = vmax.xlane.f32.xlu0 %v612
        %v614 = vpop.xlane.xlu0 %613
        %v615 = vsub.f32 %v611, %v614
        %v616 = vmul.f32 %v615, 1.442695
        %v617 = vpow.pop %v616
        %v618 = vsel %vm375, %v617, 0.0
        %619 = vadd.xlane.f32.xlu0 %v618
        %v620 = vpop.xlane.xlu0 %619
        %v621 = vrcp.pop %v620
        %v622 = vmul.f32 %v620, %v621
        %v623 = vsub.f32 1.0, %v622
        %v624 = vmul.f32 %v621, %v623
        %v625 = vadd.f32 %v621, %v624
        %vm626 = vweird.f32 %v620
        %vm627 = vweird.f32 %v621
        %vm628 = vmor %vm626, %vm627
        %v629 = vsel %vm628, %v621, %v625
        %v630 = vand.u32 2147483647, %v620
        %vm631 = vcmp.eq.f32.partialorder %v630, 8.507059e+37
        %v632 = vand.u32 %v620, 2147483648
        %v633 = vor.u32 1.1754944e-38, %v632
        %v634 = vsel %vm631, %v633, %v629
        %v635 = vmul.f32 %v617, %v634
        %636 = vrot.lane.b32.xlu0 %v370, 48
        %v637 = vpop.permute.xlu0 %636
        %v640 = vsel %vm375, %v635, 0
        %642 = vmatpush.msra.mxu0 0.0
        %643 = vmatpush.msra.mxu0 0.0
        %644 = vmatpush.msra.mxu0 0.0
        %645 = vmatpush.msra.mxu0 0.0
        %646 = vmatpush.msra.mxu0 0.0
        %647 = vmatpush.msra.mxu0 0.0
        %648 = vmatpush.msra.mxu0 0.0
        %649 = vmatpush.msra.mxu0 0.0
        %650 = vmatpush.msra.mxu0 0.0
        %651 = vmatpush.msra.mxu0 0.0
        %652 = vmatpush.msra.mxu0 0.0
        %653 = vmatpush.msra.mxu0 0.0
        %654 = vmatpush.msra.mxu0 0.0
        %655 = vmatpush.msra.mxu0 0.0
        %656 = vmatpush.msra.mxu0 0.0
        %657 = vmatpush.msra.mxu0 %v637
        %658 = vmatmul.f32.gmra.mxu0 %v640
        %v659 = vpop.f32.mrf.mxu0
        %v660 = vadd.f32 0.0, %v659
        %661 = vdwg.mxu0
        %662 = vrot.lane.b32.xlu0 %v312, 64
        %v663 = vpop.permute.xlu0 %662
        %v666 = vsel %vm375, %v660, 0
        %668 = vmatpush.msra.mxu0 0.0
        %669 = vmatpush.msra.mxu0 0.0
        %670 = vmatpush.msra.mxu0 0.0
        %671 = vmatpush.msra.mxu0 0.0
        %672 = vmatpush.msra.mxu0 0.0
        %673 = vmatpush.msra.mxu0 0.0
        %674 = vmatpush.msra.mxu0 0.0
        %675 = vmatpush.msra.mxu0 0.0
        %676 = vmatpush.msra.mxu0 0.0
        %677 = vmatpush.msra.mxu0 0.0
        %678 = vmatpush.msra.mxu0 0.0
        %679 = vmatpush.msra.mxu0 0.0
        %680 = vmatpush.msra.mxu0 0.0
        %681 = vmatpush.msra.mxu0 0.0
        %682 = vmatpush.msra.mxu0 0.0
        %683 = vmatpush.msra.mxu0 %v663
        %684 = vmatmul.f32.gmra.mxu0 %v666
        %v685 = vpop.f32.mrf.mxu0
        %v686 = vadd.f32 0.0, %v685
        %687 = vdwg.mxu0
        %v688 = vadd.f32 %v581, %v686
        %689 = vrot.lane.b32.xlu0 %v305, 104
        %v690 = vpop.permute.xlu0 %689
        %691 = vrot.lane.b32.xlu0 %v370, 72
        %v692 = vpop.permute.xlu0 %691
        %v693 = vsel %vm375, %v690, 0
        %v695 = vsel %vm375, %v692, 0
        %697 = vmatpush.xpose.msra.mxu0 0.0
        %698 = vmatpush.xpose.msra.mxu0 0.0
        %699 = vmatpush.xpose.msra.mxu0 0.0
        %700 = vmatpush.xpose.msra.mxu0 0.0
        %701 = vmatpush.xpose.msra.mxu0 0.0
        %702 = vmatpush.xpose.msra.mxu0 0.0
        %703 = vmatpush.xpose.msra.mxu0 0.0
        %704 = vmatpush.xpose.msra.mxu0 0.0
        %705 = vmatpush.xpose.msra.mxu0 0.0
        %706 = vmatpush.xpose.msra.mxu0 0.0
        %707 = vmatpush.xpose.msra.mxu0 0.0
        %708 = vmatpush.xpose.msra.mxu0 0.0
        %709 = vmatpush.xpose.msra.mxu0 0.0
        %710 = vmatpush.xpose.msra.mxu0 0.0
        %711 = vmatpush.xpose.msra.mxu0 0.0
        %712 = vmatpush.xpose.msra.mxu0 %v695
        %713 = vmatmul.f32.gmra.mxu0 %v693
        %v714 = vpop.f32.mrf.mxu0
        %v715 = vadd.f32 0.0, %v714
        %716 = vdwg.mxu0
        %v717 = vmul.f32 %v715, 0.35355338
        %v718 = vsel %vm375, %v717, -inf
        %719 = vmax.xlane.f32.xlu0 %v718
        %v720 = vpop.xlane.xlu0 %719
        %v721 = vsub.f32 %v717, %v720
        %v722 = vmul.f32 %v721, 1.442695
        %v723 = vpow.pop %v722
        %v724 = vsel %vm375, %v723, 0.0
        %725 = vadd.xlane.f32.xlu0 %v724
        %v726 = vpop.xlane.xlu0 %725
        %v727 = vrcp.pop %v726
        %v728 = vmul.f32 %v726, %v727
        %v729 = vsub.f32 1.0, %v728
        %v730 = vmul.f32 %v727, %v729
        %v731 = vadd.f32 %v727, %v730
        %vm732 = vweird.f32 %v726
        %vm733 = vweird.f32 %v727
        %vm734 = vmor %vm732, %vm733
        %v735 = vsel %vm734, %v727, %v731
        %v736 = vand.u32 2147483647, %v726
        %vm737 = vcmp.eq.f32.partialorder %v736, 8.507059e+37
        %v738 = vand.u32 %v726, 2147483648
        %v739 = vor.u32 1.1754944e-38, %v738
        %v740 = vsel %vm737, %v739, %v735
        %v741 = vmul.f32 %v723, %v740
        %742 = vrot.lane.b32.xlu0 %v370, 40
        %v743 = vpop.permute.xlu0 %742
        %v746 = vsel %vm375, %v741, 0
        %748 = vmatpush.msra.mxu0 0.0
        %749 = vmatpush.msra.mxu0 0.0
        %750 = vmatpush.msra.mxu0 0.0
        %751 = vmatpush.msra.mxu0 0.0
        %752 = vmatpush.msra.mxu0 0.0
        %753 = vmatpush.msra.mxu0 0.0
        %754 = vmatpush.msra.mxu0 0.0
        %755 = vmatpush.msra.mxu0 0.0
        %756 = vmatpush.msra.mxu0 0.0
        %757 = vmatpush.msra.mxu0 0.0
        %758 = vmatpush.msra.mxu0 0.0
        %759 = vmatpush.msra.mxu0 0.0
        %760 = vmatpush.msra.mxu0 0.0
        %761 = vmatpush.msra.mxu0 0.0
        %762 = vmatpush.msra.mxu0 0.0
        %763 = vmatpush.msra.mxu0 %v743
        %764 = vmatmul.f32.gmra.mxu0 %v746
        %v765 = vpop.f32.mrf.mxu0
        %v766 = vadd.f32 0.0, %v765
        %767 = vdwg.mxu0
        %768 = vrot.lane.b32.xlu0 %v314, 64
        %v769 = vpop.permute.xlu0 %768
        %v772 = vsel %vm375, %v766, 0
        %774 = vmatpush.msra.mxu0 0.0
        %775 = vmatpush.msra.mxu0 0.0
        %776 = vmatpush.msra.mxu0 0.0
        %777 = vmatpush.msra.mxu0 0.0
        %778 = vmatpush.msra.mxu0 0.0
        %779 = vmatpush.msra.mxu0 0.0
        %780 = vmatpush.msra.mxu0 0.0
        %781 = vmatpush.msra.mxu0 0.0
        %782 = vmatpush.msra.mxu0 0.0
        %783 = vmatpush.msra.mxu0 0.0
        %784 = vmatpush.msra.mxu0 0.0
        %785 = vmatpush.msra.mxu0 0.0
        %786 = vmatpush.msra.mxu0 0.0
        %787 = vmatpush.msra.mxu0 0.0
        %788 = vmatpush.msra.mxu0 0.0
        %789 = vmatpush.msra.mxu0 %v769
        %790 = vmatmul.f32.gmra.mxu0 %v772
        %v791 = vpop.f32.mrf.mxu0
        %v792 = vadd.f32 0.0, %v791
        %793 = vdwg.mxu0
        %v794 = vadd.f32 %v688, %v792
        %v795 = vperm.slane %v202, 0
        %v796 = vadd.f32 %v794, %v795
        %797 = vrot.lane.b32.xlu0 %v305, 96
        %v798 = vpop.permute.xlu0 %797
        %v799 = vsel %vm375, %v370, 0
        %v801 = vsel %vm375, %v798, 0
        %803 = vmatpush.xpose.msra.mxu0 0.0
        %804 = vmatpush.xpose.msra.mxu0 0.0
        %805 = vmatpush.xpose.msra.mxu0 0.0
        %806 = vmatpush.xpose.msra.mxu0 0.0
        %807 = vmatpush.xpose.msra.mxu0 0.0
        %808 = vmatpush.xpose.msra.mxu0 0.0
        %809 = vmatpush.xpose.msra.mxu0 0.0
        %810 = vmatpush.xpose.msra.mxu0 0.0
        %811 = vmatpush.xpose.msra.mxu0 0.0
        %812 = vmatpush.xpose.msra.mxu0 0.0
        %813 = vmatpush.xpose.msra.mxu0 0.0
        %814 = vmatpush.xpose.msra.mxu0 0.0
        %815 = vmatpush.xpose.msra.mxu0 0.0
        %816 = vmatpush.xpose.msra.mxu0 0.0
        %817 = vmatpush.xpose.msra.mxu0 0.0
        %818 = vmatpush.xpose.msra.mxu0 %v801
        %819 = vmatmul.f32.gmra.mxu0 %v799
        %v820 = vpop.f32.mrf.mxu0
        %v821 = vadd.f32 0.0, %v820
        %822 = vdwg.mxu0
        %v823 = vmul.f32 %v821, 0.35355338
        %v824 = vsel %vm375, %v823, -inf
        %825 = vmax.xlane.f32.xlu0 %v824
        %v826 = vpop.xlane.xlu0 %825
        %v827 = vsub.f32 %v823, %v826
        %v828 = vmul.f32 %v827, 1.442695
        %v829 = vpow.pop %v828
        %v830 = vsel %vm375, %v829, 0.0
        %831 = vadd.xlane.f32.xlu0 %v830
        %v832 = vpop.xlane.xlu0 %831
        %v833 = vrcp.pop %v832
        %v834 = vmul.f32 %v832, %v833
        %v835 = vsub.f32 1.0, %v834
        %v836 = vmul.f32 %v833, %v835
        %v837 = vadd.f32 %v833, %v836
        %vm838 = vweird.f32 %v832
        %vm839 = vweird.f32 %v833
        %vm840 = vmor %vm838, %vm839
        %v841 = vsel %vm840, %v833, %v837
        %v842 = vand.u32 2147483647, %v832
        %vm843 = vcmp.eq.f32.partialorder %v842, 8.507059e+37
        %v844 = vand.u32 %v832, 2147483648
        %v845 = vor.u32 1.1754944e-38, %v844
        %v846 = vsel %vm843, %v845, %v841
        %v847 = vmul.f32 %v829, %v846
        %848 = vrot.lane.b32.xlu0 %v305, 64
        %v849 = vpop.permute.xlu0 %848
        %v852 = vsel %vm375, %v847, 0
        %854 = vmatpush.msra.mxu0 0.0
        %855 = vmatpush.msra.mxu0 0.0
        %856 = vmatpush.msra.mxu0 0.0
        %857 = vmatpush.msra.mxu0 0.0
        %858 = vmatpush.msra.mxu0 0.0
        %859 = vmatpush.msra.mxu0 0.0
        %860 = vmatpush.msra.mxu0 0.0
        %861 = vmatpush.msra.mxu0 0.0
        %862 = vmatpush.msra.mxu0 0.0
        %863 = vmatpush.msra.mxu0 0.0
        %864 = vmatpush.msra.mxu0 0.0
        %865 = vmatpush.msra.mxu0 0.0
        %866 = vmatpush.msra.mxu0 0.0
        %867 = vmatpush.msra.mxu0 0.0
        %868 = vmatpush.msra.mxu0 0.0
        %869 = vmatpush.msra.mxu0 %v849
        %870 = vmatmul.f32.gmra.mxu0 %v852
        %v871 = vpop.f32.mrf.mxu0
        %v872 = vadd.f32 0.0, %v871
        %873 = vdwg.mxu0
        %874 = vrot.lane.b32.xlu0 %v370, 120
        %v875 = vpop.permute.xlu0 %874
        %876 = vrot.lane.b32.xlu0 %v305, 88
        %v877 = vpop.permute.xlu0 %876
        %v878 = vsel %vm375, %v875, 0
        %v880 = vsel %vm375, %v877, 0
        %882 = vmatpush.xpose.msra.mxu0 0.0
        %883 = vmatpush.xpose.msra.mxu0 0.0
        %884 = vmatpush.xpose.msra.mxu0 0.0
        %885 = vmatpush.xpose.msra.mxu0 0.0
        %886 = vmatpush.xpose.msra.mxu0 0.0
        %887 = vmatpush.xpose.msra.mxu0 0.0
        %888 = vmatpush.xpose.msra.mxu0 0.0
        %889 = vmatpush.xpose.msra.mxu0 0.0
        %890 = vmatpush.xpose.msra.mxu0 0.0
        %891 = vmatpush.xpose.msra.mxu0 0.0
        %892 = vmatpush.xpose.msra.mxu0 0.0
        %893 = vmatpush.xpose.msra.mxu0 0.0
        %894 = vmatpush.xpose.msra.mxu0 0.0
        %895 = vmatpush.xpose.msra.mxu0 0.0
        %896 = vmatpush.xpose.msra.mxu0 0.0
        %897 = vmatpush.xpose.msra.mxu0 %v880
        %898 = vmatmul.f32.gmra.mxu0 %v878
        %v899 = vpop.f32.mrf.mxu0
        %v900 = vadd.f32 0.0, %v899
        %901 = vdwg.mxu0
        %v902 = vmul.f32 %v900, 0.35355338
        %v903 = vsel %vm375, %v902, -inf
        %904 = vmax.xlane.f32.xlu0 %v903
        %v905 = vpop.xlane.xlu0 %904
        %v906 = vsub.f32 %v902, %v905
        %v907 = vmul.f32 %v906, 1.442695
        %v908 = vpow.pop %v907
        %v909 = vsel %vm375, %v908, 0.0
        %910 = vadd.xlane.f32.xlu0 %v909
        %v911 = vpop.xlane.xlu0 %910
        %v912 = vrcp.pop %v911
        %v913 = vmul.f32 %v911, %v912
        %v914 = vsub.f32 1.0, %v913
        %v915 = vmul.f32 %v912, %v914
        %v916 = vadd.f32 %v912, %v915
        %vm917 = vweird.f32 %v911
        %vm918 = vweird.f32 %v912
        %vm919 = vmor %vm917, %vm918
        %v920 = vsel %vm919, %v912, %v916
        %v921 = vand.u32 2147483647, %v911
        %vm922 = vcmp.eq.f32.partialorder %v921, 8.507059e+37
        %v923 = vand.u32 %v911, 2147483648
        %v924 = vor.u32 1.1754944e-38, %v923
        %v925 = vsel %vm922, %v924, %v920
        %v926 = vmul.f32 %v908, %v925
        %927 = vrot.lane.b32.xlu0 %v305, 56
        %v928 = vpop.permute.xlu0 %927
        %v931 = vsel %vm375, %v926, 0
        %933 = vmatpush.msra.mxu0 0.0
        %934 = vmatpush.msra.mxu0 0.0
        %935 = vmatpush.msra.mxu0 0.0
        %936 = vmatpush.msra.mxu0 0.0
        %937 = vmatpush.msra.mxu0 0.0
        %938 = vmatpush.msra.mxu0 0.0
        %939 = vmatpush.msra.mxu0 0.0
        %940 = vmatpush.msra.mxu0 0.0
        %941 = vmatpush.msra.mxu0 0.0
        %942 = vmatpush.msra.mxu0 0.0
        %943 = vmatpush.msra.mxu0 0.0
        %944 = vmatpush.msra.mxu0 0.0
        %945 = vmatpush.msra.mxu0 0.0
        %946 = vmatpush.msra.mxu0 0.0
        %947 = vmatpush.msra.mxu0 0.0
        %948 = vmatpush.msra.mxu0 %v928
        %949 = vmatmul.f32.gmra.mxu0 %v931
        %v950 = vpop.f32.mrf.mxu0
        %v951 = vadd.f32 0.0, %v950
        %952 = vdwg.mxu0
        %v955 = vsel %vm375, %v951, 0
        %957 = vmatpush.msra.mxu0 0.0
        %958 = vmatpush.msra.mxu0 0.0
        %959 = vmatpush.msra.mxu0 0.0
        %960 = vmatpush.msra.mxu0 0.0
        %961 = vmatpush.msra.mxu0 0.0
        %962 = vmatpush.msra.mxu0 0.0
        %963 = vmatpush.msra.mxu0 0.0
        %964 = vmatpush.msra.mxu0 0.0
        %965 = vmatpush.msra.mxu0 0.0
        %966 = vmatpush.msra.mxu0 0.0
        %967 = vmatpush.msra.mxu0 0.0
        %968 = vmatpush.msra.mxu0 0.0
        %969 = vmatpush.msra.mxu0 0.0
        %970 = vmatpush.msra.mxu0 0.0
        %971 = vmatpush.msra.mxu0 0.0
        %972 = vmatpush.msra.mxu0 %v333
        %973 = vmatmul.f32.gmra.mxu0 %v955
        %v974 = vpop.f32.mrf.mxu0
        %v975 = vadd.f32 0.0, %v974
        %976 = vdwg.mxu0
        %v979 = vsel %vm375, %v872, 0
        %981 = vmatpush.msra.mxu0 0.0
        %982 = vmatpush.msra.mxu0 0.0
        %983 = vmatpush.msra.mxu0 0.0
        %984 = vmatpush.msra.mxu0 0.0
        %985 = vmatpush.msra.mxu0 0.0
        %986 = vmatpush.msra.mxu0 0.0
        %987 = vmatpush.msra.mxu0 0.0
        %988 = vmatpush.msra.mxu0 0.0
        %989 = vmatpush.msra.mxu0 0.0
        %990 = vmatpush.msra.mxu0 0.0
        %991 = vmatpush.msra.mxu0 0.0
        %992 = vmatpush.msra.mxu0 0.0
        %993 = vmatpush.msra.mxu0 0.0
        %994 = vmatpush.msra.mxu0 0.0
        %995 = vmatpush.msra.mxu0 0.0
        %996 = vmatpush.msra.mxu0 %v329
        %997 = vmatmul.f32.gmra.mxu0 %v979
        %v998 = vpop.f32.mrf.mxu0
        %v999 = vadd.f32 %v975, %v998
        %1000 = vdwg.mxu0
        %1001 = vrot.lane.b32.xlu0 %v370, 112
        %v1002 = vpop.permute.xlu0 %1001
        %1003 = vrot.lane.b32.xlu0 %v305, 80
        %v1004 = vpop.permute.xlu0 %1003
        %v1005 = vsel %vm375, %v1002, 0
        %v1007 = vsel %vm375, %v1004, 0
        %1009 = vmatpush.xpose.msra.mxu0 0.0
        %1010 = vmatpush.xpose.msra.mxu0 0.0
        %1011 = vmatpush.xpose.msra.mxu0 0.0
        %1012 = vmatpush.xpose.msra.mxu0 0.0
        %1013 = vmatpush.xpose.msra.mxu0 0.0
        %1014 = vmatpush.xpose.msra.mxu0 0.0
        %1015 = vmatpush.xpose.msra.mxu0 0.0
        %1016 = vmatpush.xpose.msra.mxu0 0.0
        %1017 = vmatpush.xpose.msra.mxu0 0.0
        %1018 = vmatpush.xpose.msra.mxu0 0.0
        %1019 = vmatpush.xpose.msra.mxu0 0.0
        %1020 = vmatpush.xpose.msra.mxu0 0.0
        %1021 = vmatpush.xpose.msra.mxu0 0.0
        %1022 = vmatpush.xpose.msra.mxu0 0.0
        %1023 = vmatpush.xpose.msra.mxu0 0.0
        %1024 = vmatpush.xpose.msra.mxu0 %v1007
        %1025 = vmatmul.f32.gmra.mxu0 %v1005
        %v1026 = vpop.f32.mrf.mxu0
        %v1027 = vadd.f32 0.0, %v1026
        %1028 = vdwg.mxu0
        %v1029 = vmul.f32 %v1027, 0.35355338
        %v1030 = vsel %vm375, %v1029, -inf
        %1031 = vmax.xlane.f32.xlu0 %v1030
        %v1032 = vpop.xlane.xlu0 %1031
        %v1033 = vsub.f32 %v1029, %v1032
        %v1034 = vmul.f32 %v1033, 1.442695
        %v1035 = vpow.pop %v1034
        %v1036 = vsel %vm375, %v1035, 0.0
        %1037 = vadd.xlane.f32.xlu0 %v1036
        %v1038 = vpop.xlane.xlu0 %1037
        %v1039 = vrcp.pop %v1038
        %v1040 = vmul.f32 %v1038, %v1039
        %v1041 = vsub.f32 1.0, %v1040
        %v1042 = vmul.f32 %v1039, %v1041
        %v1043 = vadd.f32 %v1039, %v1042
        %vm1044 = vweird.f32 %v1038
        %vm1045 = vweird.f32 %v1039
        %vm1046 = vmor %vm1044, %vm1045
        %v1047 = vsel %vm1046, %v1039, %v1043
        %v1048 = vand.u32 2147483647, %v1038
        %vm1049 = vcmp.eq.f32.partialorder %v1048, 8.507059e+37
        %v1050 = vand.u32 %v1038, 2147483648
        %v1051 = vor.u32 1.1754944e-38, %v1050
        %v1052 = vsel %vm1049, %v1051, %v1047
        %v1053 = vmul.f32 %v1035, %v1052
        %1054 = vrot.lane.b32.xlu0 %v305, 48
        %v1055 = vpop.permute.xlu0 %1054
        %v1058 = vsel %vm375, %v1053, 0
        %1060 = vmatpush.msra.mxu0 0.0
        %1061 = vmatpush.msra.mxu0 0.0
        %1062 = vmatpush.msra.mxu0 0.0
        %1063 = vmatpush.msra.mxu0 0.0
        %1064 = vmatpush.msra.mxu0 0.0
        %1065 = vmatpush.msra.mxu0 0.0
        %1066 = vmatpush.msra.mxu0 0.0
        %1067 = vmatpush.msra.mxu0 0.0
        %1068 = vmatpush.msra.mxu0 0.0
        %1069 = vmatpush.msra.mxu0 0.0
        %1070 = vmatpush.msra.mxu0 0.0
        %1071 = vmatpush.msra.mxu0 0.0
        %1072 = vmatpush.msra.mxu0 0.0
        %1073 = vmatpush.msra.mxu0 0.0
        %1074 = vmatpush.msra.mxu0 0.0
        %1075 = vmatpush.msra.mxu0 %v1055
        %1076 = vmatmul.f32.gmra.mxu0 %v1058
        %v1077 = vpop.f32.mrf.mxu0
        %v1078 = vadd.f32 0.0, %v1077
        %1079 = vdwg.mxu0
        %v1082 = vsel %vm375, %v1078, 0
        %1084 = vmatpush.msra.mxu0 0.0
        %1085 = vmatpush.msra.mxu0 0.0
        %1086 = vmatpush.msra.mxu0 0.0
        %1087 = vmatpush.msra.mxu0 0.0
        %1088 = vmatpush.msra.mxu0 0.0
        %1089 = vmatpush.msra.mxu0 0.0
        %1090 = vmatpush.msra.mxu0 0.0
        %1091 = vmatpush.msra.mxu0 0.0
        %1092 = vmatpush.msra.mxu0 0.0
        %1093 = vmatpush.msra.mxu0 0.0
        %1094 = vmatpush.msra.mxu0 0.0
        %1095 = vmatpush.msra.mxu0 0.0
        %1096 = vmatpush.msra.mxu0 0.0
        %1097 = vmatpush.msra.mxu0 0.0
        %1098 = vmatpush.msra.mxu0 0.0
        %1099 = vmatpush.msra.mxu0 %v337
        %1100 = vmatmul.f32.gmra.mxu0 %v1082
        %v1101 = vpop.f32.mrf.mxu0
        %v1102 = vadd.f32 0.0, %v1101
        %1103 = vdwg.mxu0
        %v1104 = vadd.f32 %v999, %v1102
        %1105 = vrot.lane.b32.xlu0 %v370, 104
        %v1106 = vpop.permute.xlu0 %1105
        %1107 = vrot.lane.b32.xlu0 %v305, 72
        %v1108 = vpop.permute.xlu0 %1107
        %v1109 = vsel %vm375, %v1106, 0
        %v1111 = vsel %vm375, %v1108, 0
        %1113 = vmatpush.xpose.msra.mxu0 0.0
        %1114 = vmatpush.xpose.msra.mxu0 0.0
        %1115 = vmatpush.xpose.msra.mxu0 0.0
        %1116 = vmatpush.xpose.msra.mxu0 0.0
        %1117 = vmatpush.xpose.msra.mxu0 0.0
        %1118 = vmatpush.xpose.msra.mxu0 0.0
        %1119 = vmatpush.xpose.msra.mxu0 0.0
        %1120 = vmatpush.xpose.msra.mxu0 0.0
        %1121 = vmatpush.xpose.msra.mxu0 0.0
        %1122 = vmatpush.xpose.msra.mxu0 0.0
        %1123 = vmatpush.xpose.msra.mxu0 0.0
        %1124 = vmatpush.xpose.msra.mxu0 0.0
        %1125 = vmatpush.xpose.msra.mxu0 0.0
        %1126 = vmatpush.xpose.msra.mxu0 0.0
        %1127 = vmatpush.xpose.msra.mxu0 0.0
        %1128 = vmatpush.xpose.msra.mxu0 %v1111
        %1129 = vmatmul.f32.gmra.mxu0 %v1109
        %v1130 = vpop.f32.mrf.mxu0
        %v1131 = vadd.f32 0.0, %v1130
        %1132 = vdwg.mxu0
        %v1133 = vmul.f32 %v1131, 0.35355338
        %v1134 = vsel %vm375, %v1133, -inf
        %1135 = vmax.xlane.f32.xlu0 %v1134
        %v1136 = vpop.xlane.xlu0 %1135
        %v1137 = vsub.f32 %v1133, %v1136
        %v1138 = vmul.f32 %v1137, 1.442695
        %v1139 = vpow.pop %v1138
        %v1140 = vsel %vm375, %v1139, 0.0
        %1141 = vadd.xlane.f32.xlu0 %v1140
        %v1142 = vpop.xlane.xlu0 %1141
        %v1143 = vrcp.pop %v1142
        %v1144 = vmul.f32 %v1142, %v1143
        %v1145 = vsub.f32 1.0, %v1144
        %v1146 = vmul.f32 %v1143, %v1145
        %v1147 = vadd.f32 %v1143, %v1146
        %vm1148 = vweird.f32 %v1142
        %vm1149 = vweird.f32 %v1143
        %vm1150 = vmor %vm1148, %vm1149
        %v1151 = vsel %vm1150, %v1143, %v1147
        %v1152 = vand.u32 2147483647, %v1142
        %vm1153 = vcmp.eq.f32.partialorder %v1152, 8.507059e+37
        %v1154 = vand.u32 %v1142, 2147483648
        %v1155 = vor.u32 1.1754944e-38, %v1154
        %v1156 = vsel %vm1153, %v1155, %v1151
        %v1157 = vmul.f32 %v1139, %v1156
        %1158 = vrot.lane.b32.xlu0 %v305, 40
        %v1159 = vpop.permute.xlu0 %1158
        %v1162 = vsel %vm375, %v1157, 0
        %1164 = vmatpush.msra.mxu0 0.0
        %1165 = vmatpush.msra.mxu0 0.0
        %1166 = vmatpush.msra.mxu0 0.0
        %1167 = vmatpush.msra.mxu0 0.0
        %1168 = vmatpush.msra.mxu0 0.0
        %1169 = vmatpush.msra.mxu0 0.0
        %1170 = vmatpush.msra.mxu0 0.0
        %1171 = vmatpush.msra.mxu0 0.0
        %1172 = vmatpush.msra.mxu0 0.0
        %1173 = vmatpush.msra.mxu0 0.0
        %1174 = vmatpush.msra.mxu0 0.0
        %1175 = vmatpush.msra.mxu0 0.0
        %1176 = vmatpush.msra.mxu0 0.0
        %1177 = vmatpush.msra.mxu0 0.0
        %1178 = vmatpush.msra.mxu0 0.0
        %1179 = vmatpush.msra.mxu0 %v1159
        %1180 = vmatmul.f32.gmra.mxu0 %v1162
        %v1181 = vpop.f32.mrf.mxu0
        %v1182 = vadd.f32 0.0, %v1181
        %1183 = vdwg.mxu0
        %v1186 = vsel %vm375, %v1182, 0
        %1188 = vmatpush.msra.mxu0 0.0
        %1189 = vmatpush.msra.mxu0 0.0
        %1190 = vmatpush.msra.mxu0 0.0
        %1191 = vmatpush.msra.mxu0 0.0
        %1192 = vmatpush.msra.mxu0 0.0
        %1193 = vmatpush.msra.mxu0 0.0
        %1194 = vmatpush.msra.mxu0 0.0
        %1195 = vmatpush.msra.mxu0 0.0
        %1196 = vmatpush.msra.mxu0 0.0
        %1197 = vmatpush.msra.mxu0 0.0
        %1198 = vmatpush.msra.mxu0 0.0
        %1199 = vmatpush.msra.mxu0 0.0
        %1200 = vmatpush.msra.mxu0 0.0
        %1201 = vmatpush.msra.mxu0 0.0
        %1202 = vmatpush.msra.mxu0 0.0
        %1203 = vmatpush.msra.mxu0 %v341
        %1204 = vmatmul.f32.gmra.mxu0 %v1186
        %v1205 = vpop.f32.mrf.mxu0
        %v1206 = vadd.f32 0.0, %v1205
        %1207 = vdwg.mxu0
        %v1208 = vadd.f32 %v1104, %v1206
        %v1209 = vperm.slane %v203, 0
        %v1210 = vadd.f32 %v1208, %v1209
        %v1211 = vadd.f32 %v1210, %v1210
        %v1212 = vadd.f32 %v796, %v796
        %v1213 = vsel %vm208, %v1211, 0.0
        %1214 = vadd.xlane.f32.xlu0 %v1213
        %v1215 = vpop.xlane.xlu0 %1214
        %v1216 = vmul.f32 %v1211, %v1211
        %v1217 = vsel %vm208, %v1216, 0.0
        %1218 = vadd.xlane.f32.xlu0 %v1217
        %v1219 = vpop.xlane.xlu0 %1218
        %v1220 = vmul.f32 %v1215, 0.03125
        %v1221 = vmul.f32 %v1219, 0.03125
        %v1222 = vmul.f32 %v1220, %v1220
        %v1223 = vsub.f32 %v1221, %v1222
        %v1224 = vadd.f32 %v1223, 1e-05
        %v1225 = vrsqrt.pop %v1224
        %v1226 = vmul.f32 %v1225, %v1224
        %v1227 = vmul.f32 %v1226, %v1225
        %v1228 = vmul.f32 0.5, %v1227
        %v1229 = vsub.f32 1.5, %v1228
        %v1230 = vmul.f32 %v1225, %v1229
        %vm1231 = vweird.f32 %v1224
        %vm1232 = vweird.f32 %v1225
        %vm1233 = vmor %vm1231, %vm1232
        %v1234 = vsel %vm1233, %v1225, %v1230
        %v1235 = vsub.f32 %v1211, %v1220
        %v1236 = vmul.f32 %v1235, %v1234
        %v1237 = vperm.slane %v198, 0
        %v1238 = vmul.f32 %v1236, %v1237
        %v1239 = vperm.slane %v199, 0
        %v1240 = vadd.f32 %v1238, %v1239
        %v1241 = vld [vmem:[%s2 + $0x10] sm:$0xff]
        %v1242 = vld [vmem:[%s2 + $0x30] sm:$0xff]
        %v1243 = vld [vmem:[%s2 + $0x50] sm:$0xff]
        %v1244 = vld [vmem:[%s2 + $0x70] sm:$0xff]
        %v1245 = vperm.slane %v206, 0
        %v1247 = vsel %vm208, %v1240, 0
        %1249 = vmatpush.msra.mxu0 0.0
        %1250 = vmatpush.msra.mxu0 0.0
        %1251 = vmatpush.msra.mxu0 0.0
        %1252 = vmatpush.msra.mxu0 0.0
        %1253 = vmatpush.msra.mxu0 0.0
        %1254 = vmatpush.msra.mxu0 0.0
        %1255 = vmatpush.msra.mxu0 0.0
        %1256 = vmatpush.msra.mxu0 0.0
        %1257 = vmatpush.msra.mxu0 0.0
        %1258 = vmatpush.msra.mxu0 0.0
        %1259 = vmatpush.msra.mxu0 0.0
        %1260 = vmatpush.msra.mxu0 0.0
        %1261 = vmatpush.msra.mxu0 %v1244
        %1262 = vmatpush.msra.mxu0 %v1243
        %1263 = vmatpush.msra.mxu0 %v1242
        %1264 = vmatpush.msra.mxu0 %v1241
        %1265 = vmatmul.f32.gmra.mxu0 %v1247
        %v1266 = vpop.f32.mrf.mxu0
        %v1267 = vadd.f32 %v1245, %v1266
        %1268 = vdwg.mxu0
        %v1269 = vmul.f32 %v1267, 0.5
        %v1270 = vmul.f32 %v1267, 0.044715
        %v1271 = vmul.f32 %v1270, %v1267
        %v1272 = vmul.f32 %v1271, %v1267
        %v1273 = vadd.f32 %v1267, %v1272
        %v1274 = vmul.f32 %v1273, 0.7978846
        %v1275 = vtanh.pop %v1274
        %v1276 = vadd.f32 %v1275, 1.0
        %v1277 = vmul.f32 %v1269, %v1276
        %v1278 = vld [vmem:[%s3] sm:$0xff]
        %v1279 = vld [vmem:[%s3 + $0x8] sm:$0xff]
        %v1280 = vld [vmem:[%s3 + $0x10] sm:$0xff]
        %v1281 = vld [vmem:[%s3 + $0x18] sm:$0xff]
        %v1282 = vld [vmem:[%s3 + $0x20] sm:$0xff]
        %v1283 = vld [vmem:[%s3 + $0x28] sm:$0xff]
        %v1284 = vld [vmem:[%s3 + $0x30] sm:$0xff]
        %v1285 = vld [vmem:[%s3 + $0x38] sm:$0xff]
        %v1286 = vld [vmem:[%s3 + $0x40] sm:$0xff]
        %v1287 = vld [vmem:[%s3 + $0x48] sm:$0xff]
        %v1288 = vld [vmem:[%s3 + $0x50] sm:$0xff]
        %v1289 = vld [vmem:[%s3 + $0x58] sm:$0xff]
        %v1290 = vld [vmem:[%s3 + $0x60] sm:$0xff]
        %v1291 = vld [vmem:[%s3 + $0x68] sm:$0xff]
        %v1292 = vld [vmem:[%s3 + $0x70] sm:$0xff]
        %v1293 = vld [vmem:[%s3 + $0x78] sm:$0xff]
        %1294 = vmatpush.msra.mxu0 %v1293
        %1295 = vmatpush.msra.mxu0 %v1292
        %1296 = vmatpush.msra.mxu0 %v1291
        %1297 = vmatpush.msra.mxu0 %v1290
        %1298 = vmatpush.msra.mxu0 %v1289
        %1299 = vmatpush.msra.mxu0 %v1288
        %1300 = vmatpush.msra.mxu0 %v1287
        %1301 = vmatpush.msra.mxu0 %v1286
        %1302 = vmatpush.msra.mxu0 %v1285
        %1303 = vmatpush.msra.mxu0 %v1284
        %1304 = vmatpush.msra.mxu0 %v1283
        %1305 = vmatpush.msra.mxu0 %v1282
        %1306 = vmatpush.msra.mxu0 %v1281
        %1307 = vmatpush.msra.mxu0 %v1280
        %1308 = vmatpush.msra.mxu0 %v1279
        %1309 = vmatpush.msra.mxu0 %v1278
        %1310 = vmatmul.f32.gmra.mxu0 %v1277
        %v1311 = vpop.f32.mrf.mxu0
        %v1312 = vadd.f32 0.0, %v1311
        %1313 = vdwg.mxu0
        %v1314 = vadd.f32 %v1211, %v1312
        %v1315 = vperm.slane %v204, 0
        %v1316 = vadd.f32 %v1314, %v1315
        %v1317 = vsel %vm208, %v1212, 0.0
        %1318 = vadd.xlane.f32.xlu0 %v1317
        %v1319 = vpop.xlane.xlu0 %1318
        %v1320 = vmul.f32 %v1212, %v1212
        %v1321 = vsel %vm208, %v1320, 0.0
        %1322 = vadd.xlane.f32.xlu0 %v1321
        %v1323 = vpop.xlane.xlu0 %1322
        %v1324 = vmul.f32 %v1319, 0.03125
        %v1325 = vmul.f32 %v1323, 0.03125
        %v1326 = vmul.f32 %v1324, %v1324
        %v1327 = vsub.f32 %v1325, %v1326
        %v1328 = vadd.f32 %v1327, 1e-05
        %v1329 = vrsqrt.pop %v1328
        %v1330 = vmul.f32 %v1329, %v1328
        %v1331 = vmul.f32 %v1330, %v1329
        %v1332 = vmul.f32 0.5, %v1331
        %v1333 = vsub.f32 1.5, %v1332
        %v1334 = vmul.f32 %v1329, %v1333
        %vm1335 = vweird.f32 %v1328
        %vm1336 = vweird.f32 %v1329
        %vm1337 = vmor %vm1335, %vm1336
        %v1338 = vsel %vm1337, %v1329, %v1334
        %v1339 = vsub.f32 %v1212, %v1324
        %v1340 = vmul.f32 %v1339, %v1338
        %v1341 = vperm.slane %v200, 0
        %v1342 = vmul.f32 %v1340, %v1341
        %v1343 = vperm.slane %v201, 0
        %v1344 = vadd.f32 %v1342, %v1343
        %v1345 = vld [vmem:[%s2 + $0x18] sm:$0xff]
        %v1346 = vld [vmem:[%s2 + $0x38] sm:$0xff]
        %v1347 = vld [vmem:[%s2 + $0x58] sm:$0xff]
        %v1348 = vld [vmem:[%s2 + $0x78] sm:$0xff]
        %v1349 = vperm.slane %v207, 0
        %v1351 = vsel %vm208, %v1344, 0
        %1353 = vmatpush.msra.mxu0 0.0
        %1354 = vmatpush.msra.mxu0 0.0
        %1355 = vmatpush.msra.mxu0 0.0
        %1356 = vmatpush.msra.mxu0 0.0
        %1357 = vmatpush.msra.mxu0 0.0
        %1358 = vmatpush.msra.mxu0 0.0
        %1359 = vmatpush.msra.mxu0 0.0
        %1360 = vmatpush.msra.mxu0 0.0
        %1361 = vmatpush.msra.mxu0 0.0
        %1362 = vmatpush.msra.mxu0 0.0
        %1363 = vmatpush.msra.mxu0 0.0
        %1364 = vmatpush.msra.mxu0 0.0
        %1365 = vmatpush.msra.mxu0 %v1348
        %1366 = vmatpush.msra.mxu0 %v1347
        %1367 = vmatpush.msra.mxu0 %v1346
        %1368 = vmatpush.msra.mxu0 %v1345
        %1369 = vmatmul.f32.gmra.mxu0 %v1351
        %v1370 = vpop.f32.mrf.mxu0
        %v1371 = vadd.f32 %v1349, %v1370
        %1372 = vdwg.mxu0
        %v1373 = vmul.f32 %v1371, 0.5
        %v1374 = vmul.f32 %v1371, 0.044715
        %v1375 = vmul.f32 %v1374, %v1371
        %v1376 = vmul.f32 %v1375, %v1371
        %v1377 = vadd.f32 %v1371, %v1376
        %v1378 = vmul.f32 %v1377, 0.7978846
        %v1379 = vtanh.pop %v1378
        %v1380 = vadd.f32 %v1379, 1.0
        %v1381 = vmul.f32 %v1373, %v1380
        %1398 = vrot.lane.b32.xlu0 %v1278, 96
        %v1399 = vpop.permute.xlu0 %1398
        %1400 = vrot.lane.b32.xlu0 %v1279, 96
        %v1401 = vpop.permute.xlu0 %1400
        %1402 = vrot.lane.b32.xlu0 %v1280, 96
        %v1403 = vpop.permute.xlu0 %1402
        %1404 = vrot.lane.b32.xlu0 %v1281, 96
        %v1405 = vpop.permute.xlu0 %1404
        %1406 = vrot.lane.b32.xlu0 %v1282, 96
        %v1407 = vpop.permute.xlu0 %1406
        %1408 = vrot.lane.b32.xlu0 %v1283, 96
        %v1409 = vpop.permute.xlu0 %1408
        %1410 = vrot.lane.b32.xlu0 %v1284, 96
        %v1411 = vpop.permute.xlu0 %1410
        %1412 = vrot.lane.b32.xlu0 %v1285, 96
        %v1413 = vpop.permute.xlu0 %1412
        %1414 = vrot.lane.b32.xlu0 %v1286, 96
        %v1415 = vpop.permute.xlu0 %1414
        %1416 = vrot.lane.b32.xlu0 %v1287, 96
        %v1417 = vpop.permute.xlu0 %1416
        %1418 = vrot.lane.b32.xlu0 %v1288, 96
        %v1419 = vpop.permute.xlu0 %1418
        %1420 = vrot.lane.b32.xlu0 %v1289, 96
        %v1421 = vpop.permute.xlu0 %1420
        %1422 = vrot.lane.b32.xlu0 %v1290, 96
        %v1423 = vpop.permute.xlu0 %1422
        %1424 = vrot.lane.b32.xlu0 %v1291, 96
        %v1425 = vpop.permute.xlu0 %1424
        %1426 = vrot.lane.b32.xlu0 %v1292, 96
        %v1427 = vpop.permute.xlu0 %1426
        %1428 = vrot.lane.b32.xlu0 %v1293, 96
        %v1429 = vpop.permute.xlu0 %1428
        %1446 = vmatpush.msra.mxu0 %v1429
        %1447 = vmatpush.msra.mxu0 %v1427
        %1448 = vmatpush.msra.mxu0 %v1425
        %1449 = vmatpush.msra.mxu0 %v1423
        %1450 = vmatpush.msra.mxu0 %v1421
        %1451 = vmatpush.msra.mxu0 %v1419
        %1452 = vmatpush.msra.mxu0 %v1417
        %1453 = vmatpush.msra.mxu0 %v1415
        %1454 = vmatpush.msra.mxu0 %v1413
        %1455 = vmatpush.msra.mxu0 %v1411
        %1456 = vmatpush.msra.mxu0 %v1409
        %1457 = vmatpush.msra.mxu0 %v1407
        %1458 = vmatpush.msra.mxu0 %v1405
        %1459 = vmatpush.msra.mxu0 %v1403
        %1460 = vmatpush.msra.mxu0 %v1401
        %1461 = vmatpush.msra.mxu0 %v1399
        %1462 = vmatmul.f32.gmra.mxu0 %v1381
        %v1463 = vpop.f32.mrf.mxu0
        %v1464 = vadd.f32 0.0, %v1463
        %1465 = vdwg.mxu0
        %v1466 = vadd.f32 %v1212, %v1464
        %v1467 = vperm.slane %v205, 0
        %v1468 = vadd.f32 %v1466, %v1467
        %1469 = vst.msk [vmem:[%s188] sm:$0xff] %vm208, %v1316
        %1471 = vrot.lane.b32.xlu0 %v1468, 32
        %v1472 = vpop.permute.xlu0 %1471
        %vm1474 = vcmask 523520
        %1475 = vst.msk [vmem:[%s188] sm:$0xff] %vm1474, %v1472
        %s1476 = sand.u32 %s115, 1
        %s1477 = scalar_lea.sflag [#allocation3], %s1476
        %s1478 = sand.u32 %s115, 1
        %s1479 = smul.addr %s1478, 8
        %s1480 = scalar_lea.vmem [#allocation2], %s1479
        // Predicated region
        $region37: #{tpu_custom_call.1} parent=35 // pred_check
          %p1481 = pneg %p125
        $region38: #{tpu_custom_call.1} parent=35 // pred_check_branch
          %1483 = sbr.rel (%p1481) target = $region40
        $region39: #{tpu_custom_call.1} parent=35 // pred_region
          %1485 = vsyncadd %s1477, 0
          %s1486 = smul.addr %s18, 8
          %s1487 = scalar_lea.hbm %s4, %s1486
          %s1489 = sshll.u32 %s1480, 4
          %s1490 = int_to_ptr.vmem [resolvable:$true] %s1489
          %s1491 = sshll.u32 %s1487, 4
          %s1492 = int_to_ptr.hbm [resolvable:$true] %s1491
          %1494 = dma.vmem_to_hbm [thread:$0]  %s1490, 128, %s1492, %s1477
        $region40: #{tpu_custom_call.1} parent=35 // pred_fallthru
          _
      $region36: #{tpu_custom_call.1} parent=5 // pred_fallthru
        _
      %p1495 = scmp.le.s32.totalorder 2, %s13
      // Predicated region
      $region41: #{tpu_custom_call.1} parent=5 // pred_check
        %p1496 = pneg %p1495
      $region42: #{tpu_custom_call.1} parent=5 // pred_check_branch
        %1498 = sbr.rel (%p1496) target = $region44
      $region43: #{tpu_custom_call.1} parent=5 // pred_region
        %s1499 = ssub.s32 %s13, 2
        // Predicated region
        $region45: #{tpu_custom_call.1} parent=43 // pred_check
          %p1500 = pneg %p131
        $region46: #{tpu_custom_call.1} parent=43 // pred_check_branch
          %1502 = sbr.rel (%p1500) target = $region48
        $region47: #{tpu_custom_call.1} parent=43 // pred_region
          %s1503 = sand.u32 %s116, 1
          %s1504 = scalar_lea.sflag [#allocation3], %s1503
          %s1505 = sand.u32 %s116, 1
          %s1506 = smul.addr %s1505, 8
          %s1507 = scalar_lea.vmem [#allocation2], %s1506
          %1509 = dma.done %s1504, 128
        $region48: #{tpu_custom_call.1} parent=43 // pred_fallthru
          _
      $region44: #{tpu_custom_call.1} parent=5 // pred_fallthru
        _
    $region6: #{tpu_custom_call.1} parent=1 // loop_footer
      %s17 = sadd.s32 1, %s13
    $region7: #{tpu_custom_call.1} parent=1 // loop_footer_branch
      %12 = sbr.rel target = $region3
    $region8: #{tpu_custom_call.1} parent=1 // loop_exit
      _
    %1510 = vsyncpa [#allocation3], 1
    %s1511 = scalar_lea.sflag [#allocation3], 1
    %1512 = vsyncpa %s1511, 1

</llo_original>
